<compile_context>
chip_gen: v5e
topology: v5e:2x2
jax: 0.10.0
libtpu: 0.0.40
codegen_flags: <defaults>
</compile_context>

<pallas_src>
import functools

import jax
import jax.numpy as jnp
from jax.experimental import pallas as pl
from jax.experimental.pallas import tpu as pltpu


_SMALL_INPUT_BYTES = 256 << 10   # below this, pallas dispatch overhead dominates
_MEGACORE_SPLIT_BYTES = 2 << 20  # above this, force an even grid >= 2 (v7x 2 TCs)


def _clamp_kernel(x_ref, o_ref, *, lo, hi):
    # Elementwise clamp; weakly-typed Python bounds keep compute in the input
    # dtype (bf16 stays bf16, f32 stays f32, ints stay ints). Pure VPU min/max.
    o_ref[...] = jnp.clip(x_ref[...], lo, hi)


def _chip_params():
    """Return (target_tile_bytes, vmem_limit_cap) from the physical VMEM size."""
    try:
        phys_vmem = int(pltpu.get_tpu_info().vmem_capacity_bytes)
    except Exception:  # conservative default: assume the smallest (v7x-sized) VMEM
        phys_vmem = 64 << 20
    if phys_vmem <= (96 << 20):
        # v7x-class: 64 MiB VMEM, ~3.2 TB/s per TC. Bigger tiles hide the
        # ~0.35us per-grid-step overhead; keep several MiB of VMEM headroom.
        return 10 << 20, 48 << 20
    # v5e / v6e class: 128 MiB physical VMEM; 8 MiB tiles sit at the roofline.
    return 8 << 20, 40 << 20


def clamp(
    x: jax.Array,
    min_val: float = -1.0,
    max_val: float = 1.0,
    *,
    target_tile_bytes: int | None = None,
) -> jax.Array:
    """Apply clamp(x, min_val, max_val) elementwise to an array of any shape."""
    orig_shape = x.shape
    dtype = x.dtype
    n = x.size

    # torch.clamp-in-dtype semantics: integer tensors get integer bounds.
    if jnp.issubdtype(dtype, jnp.integer):
        lo, hi = int(min_val), int(max_val)
    else:
        lo, hi = float(min_val), float(max_val)

    itemsize = jnp.dtype(dtype).itemsize

    # Fallbacks with ZERO extra HBM traffic (no pad / slice round trips):
    #  * tiny inputs: fixed pallas_call dispatch dominates and XLA fuses the
    #    clip into neighbors for free;
    #  * non-128-aligned sizes: can't be reshaped into a lane-dense 2D slab
    #    without a pad+slice round trip (3x traffic), so let XLA's fused
    #    elementwise clip handle them at 1 read + 1 write.
    if n == 0 or n * itemsize < _SMALL_INPUT_BYTES or n % 128 != 0:
        return jnp.clip(x, lo, hi)

    # Chip-aware tile target / VMEM budget.
    chip_tile, vmem_cap = _chip_params()
    if target_tile_bytes is None:
        target_tile_bytes = chip_tile
    else:
        # Keep 4x tile (in+out, double-buffered) + headroom within the cap.
        target_tile_bytes = max(1 << 20,
                                min(int(target_tile_bytes), (vmem_cap - (2 << 20)) // 4))

    # Widest lane-dense last dim that divides n exactly -> unmasked vst stream.
    lanes = 128
    for cand in (2048, 1024, 512, 256):
        if n % cand == 0:
            lanes = cand
            break

    rows = n // lanes
    x2d = x.reshape(rows, lanes)          # contiguous reshape: no copy
    total_bytes = n * itemsize

    # Rows per block targeting ~target_tile_bytes, multiple of 8.
    max_block_rows = max(8, (target_tile_bytes // (lanes * itemsize)) // 8 * 8)

    # Pick the number of grid steps first:
    #  * enough to keep blocks <= target tile size,
    #  * >= 2 once the array is big enough to shard across both v7x TensorCores,
    #  * even, so neither core idles on a remainder step.
    n_blocks = max(1, pl.cdiv(rows, max_block_rows))
    if total_bytes > _MEGACORE_SPLIT_BYTES:
        n_blocks = max(n_blocks, 2)
    if n_blocks > 1 and n_blocks % 2 == 1:
        n_blocks += 1

    if n_blocks == 1:
        block_rows = rows                 # full-dim block: always legal
    else:
        block_rows = max(8, ((pl.cdiv(rows, n_blocks) + 7) // 8) * 8)
    grid = (pl.cdiv(rows, block_rows),)

    block_bytes = block_rows * lanes * itemsize
    # in + out, double-buffered each, plus headroom; stays under the chip cap.
    vmem_limit = int(min(max(4 * block_bytes + (2 << 20), 16 << 20), vmem_cap))

    kernel = functools.partial(_clamp_kernel, lo=lo, hi=hi)

    out2d = pl.pallas_call(
        kernel,
        out_shape=jax.ShapeDtypeStruct((rows, lanes), dtype),
        grid_spec=pltpu.PrefetchScalarGridSpec(
            num_scalar_prefetch=0,
            grid=grid,
            in_specs=[pl.BlockSpec((block_rows, lanes), lambda i: (i, 0))],
            out_specs=pl.BlockSpec((block_rows, lanes), lambda i: (i, 0)),
        ),
        compiler_params=pltpu.CompilerParams(
            dimension_semantics=("parallel",),
            vmem_limit_bytes=vmem_limit,
        ),
        # TODO(synk): add input_output_aliases={0: 0} when the caller can donate x.
    )(x2d)

    return out2d.reshape(orig_shape)


if __name__ == "__main__":
    key = jax.random.PRNGKey(0)
    k1, k2, k3, k4 = jax.random.split(key, 4)

    # Small NCHW input like the PyTorch module (small-input fast path).
    x_small = 3.0 * jax.random.normal(k1, (2, 4, 16, 16), dtype=jnp.float32)
    y_small = clamp(x_small, -1.0, 1.0)
    jax.block_until_ready(y_small)
    assert y_small.shape == x_small.shape and y_small.dtype == x_small.dtype
    assert jnp.array_equal(y_small, jnp.clip(x_small, -1.0, 1.0))

    # Larger NCHW feature map -> Pallas path, grid split across TensorCores.
    x_big = 3.0 * jax.random.normal(k2, (2, 64, 128, 64), dtype=jnp.float32)
    y_big = clamp(x_big, -1.0, 1.0)
    jax.block_until_ready(y_big)
    assert y_big.shape == x_big.shape and y_big.dtype == x_big.dtype
    assert jnp.array_equal(y_big, jnp.clip(x_big, -1.0, 1.0))

    # bf16 with non-default bounds -> Pallas path, single block.
    x_bf = (2.0 * jax.random.normal(k3, (4, 256, 512), dtype=jnp.float32)).astype(jnp.bfloat16)
    y_bf = clamp(x_bf, -0.5, 0.5)
    jax.block_until_ready(y_bf)
    assert y_bf.shape == x_bf.shape and y_bf.dtype == x_bf.dtype
    assert jnp.array_equal(y_bf, jnp.clip(x_bf, -0.5, 0.5))

    # Ragged (non-128-aligned) tiny shape -> fused XLA clip fallback.
    x_odd = 2.0 * jax.random.normal(k4, (3, 5, 7), dtype=jnp.float32)
    y_odd = clamp(x_odd, -0.25, 0.75)
    jax.block_until_ready(y_odd)
    assert y_odd.shape == x_odd.shape and y_odd.dtype == x_odd.dtype
    assert jnp.array_equal(y_odd, jnp.clip(x_odd, -0.25, 0.75))

    print("KERNEL_OK")
</pallas_src>

<mosaic_0001>
module attributes {stable_mosaic.version = 11 : i64} {
  func.func @_clamp_kernel(%arg0: i32, %arg1: memref<256x2048xf32, #tpu.memory_space<vmem>>, %arg2: memref<256x2048xf32, #tpu.memory_space<vmem>>) attributes {dimension_semantics = [#tpu.dimension_semantics<parallel>], iteration_bounds = array<i64: 2>, scalar_prefetch = 0 : i64, scratch_operands = 0 : i64, tpu.core_type = #tpu.core_type<tc>, window_params = [{transform_indices = @transform_0, window_bounds = array<i64: 256, 2048>}, {transform_indices = @transform_1, window_bounds = array<i64: 256, 2048>}]} {
    %c0 = arith.constant 0 : index
    %c0_0 = arith.constant 0 : index
    %0 = vector.load %arg1[%c0, %c0_0] : memref<256x2048xf32, #tpu.memory_space<vmem>>, vector<256x2048xf32>
    %cst = arith.constant -1.000000e+00 : f32
    %cst_1 = arith.constant 1.000000e+00 : f32
    %1 = vector.broadcast %cst : f32 to vector<256x2048xf32>
    %2 = arith.maximumf %1, %0 : vector<256x2048xf32>
    %3 = vector.broadcast %cst_1 : f32 to vector<256x2048xf32>
    %4 = arith.minimumf %3, %2 : vector<256x2048xf32>
    %c0_2 = arith.constant 0 : index
    %c0_3 = arith.constant 0 : index
    %5 = vector.load %arg2[%c0_2, %c0_3] : memref<256x2048xf32, #tpu.memory_space<vmem>>, vector<256x2048xf32>
    tpu.vector_store %arg2[%c0_2, %c0_3], %4 {strides = array<i32>} : memref<256x2048xf32, #tpu.memory_space<vmem>>, vector<256x2048xf32>,
    return
  }
  func.func @transform_0(%arg0: i32) -> (i32, i32) {
    %c0_i32 = arith.constant 0 : i32
    %c0_i32_0 = arith.constant 0 : i32
    return %arg0, %c0_i32 : i32, i32
  }
  func.func @transform_1(%arg0: i32) -> (i32, i32) {
    %c0_i32 = arith.constant 0 : i32
    %c0_i32_0 = arith.constant 0 : i32
    return %arg0, %c0_i32 : i32, i32
  }
}

</mosaic_0001>

<llo_original>
// kernel: tpu_custom_call.1
$region0: #{tpu_custom_call.1}
  #allocation0 [shape = 'u32[]', space=smem, size = 0x4, offset = 0x4, fixed_abs, tag = 'smem constant byte address 0x4 - core index']
  #allocation1 [shape = 'u32[72,128]{1,0:T(1,128)}', space=vmem, size = 0x9000, scoped, tag = 'internal scratch']
  %s0 = inlined_call_operand.hbm [shape: f32[512,2048], index: 0, kind: input, shape index: {}]
  %s1 = inlined_call_operand.hbm [shape: f32[512,2048], index: 1, kind: output, shape index: {}]
  %s2 = sld [smem:[#allocation0]]
  $region41: #{tpu_custom_call.1} parent=0
    _
  %s4 = ssub.s32 1, %s2
  %s5 = scalar_select 0, %s4, %s2
  $region1: #{tpu_custom_call.1} parent=0
    #allocation2 [shape = 'u8[4194304]{0}', space=vmem, size = 0x400000, scoped, tag = 'input window, operand 0']
    #allocation3 [shape = 's32[2]{0}', space=sflag, size = 0x8, scoped, tag = 'scoped memory for tpu_custom_call.1']
    #allocation4 [shape = 's32[2]{0}', space=sflag, size = 0x8, scoped, tag = 'scoped memory for tpu_custom_call.1']
    #allocation5 [shape = 'u8[4194304]{0}', space=vmem, size = 0x400000, scoped, tag = 'output window, operand 0']
    %6 = vsyncpa [#allocation3], 0
    %s7 = scalar_lea.sflag [#allocation3], 1
    %8 = vsyncpa %s7, 0
    %9 = vsyncpa [#allocation4], 0
    %s10 = scalar_lea.sflag [#allocation4], 1
    %11 = vsyncpa %s10, 0
    loop: start=0, step=1, limit=4
    $region2: #{tpu_custom_call.1} parent=1 // loop_pre_header
      _
    $region3: #{tpu_custom_call.1} parent=1 // loop_header
      %s13 = sphi 0, %s17
      %p14 = scmp.ge.s32.totalorder %s13, 4
      %s23 = sphi 0, %s25
      %s26 = sphi 0, %s23
      %s27 = sphi 0, %s26
      %s43 = sphi 0, %s27
      %s49 = sphi 0, %s51
      %s52 = sphi 0, %s49
      %s53 = sphi 0, %s52
      %s69 = sphi 0, %s53
    $region4: #{tpu_custom_call.1} parent=1 // loop_header_branch
      %16 = sbr.rel (%p14) target = $region8
    $region5: #{tpu_custom_call.1} parent=1 // loop_body
      %s18 = ssub.s32 %s13, 1
      %s19 = ssub.s32 %s13, 2
      %s20 = sadd.s32 %s13, 1
      %s21 = ssub.s32 %s13, %s20
      %p22 = scmp.eq.s32.totalorder %s21, 0
      %s24 = sadd.s32 %s23, 1
      %s25 = scalar_select %p22, %s23, %s24
      %p28 = pneg %p22
      %p29 = scmp.eq.s32.totalorder %s13, 1
      %p30 = por %p28, %p29
      %p31 = scmp.ne.s32.totalorder %s23, %s26
      %p32 = scmp.eq.s32.totalorder %s13, 0
      %p33 = por %p31, %p32
      %p34 = scmp.ne.s32.totalorder %s23, %s26
      %p35 = scmp.eq.s32.totalorder %s18, 1
      %p36 = por %p34, %p35
      %p37 = scmp.ne.s32.totalorder %s26, %s27
      %p38 = scmp.eq.s32.totalorder %s18, 0
      %p39 = por %p37, %p38
      %p40 = scmp.ne.s32.totalorder %s26, %s27
      %p41 = scmp.eq.s32.totalorder %s19, 1
      %p42 = por %p40, %p41
      %p44 = scmp.ne.s32.totalorder %s27, %s43
      %p45 = scmp.eq.s32.totalorder %s19, 0
      %p46 = por %p44, %p45
      %s47 = ssub.s32 %s13, %s20
      %p48 = scmp.eq.s32.totalorder %s47, 0
      %s50 = sadd.s32 %s49, 1
      %s51 = scalar_select %p48, %s49, %s50
      %p54 = pneg %p48
      %p55 = scmp.eq.s32.totalorder %s13, 1
      %p56 = por %p54, %p55
      %p57 = scmp.ne.s32.totalorder %s49, %s52
      %p58 = scmp.eq.s32.totalorder %s13, 0
      %p59 = por %p57, %p58
      %p60 = scmp.ne.s32.totalorder %s49, %s52
      %p61 = scmp.eq.s32.totalorder %s18, 1
      %p62 = por %p60, %p61
      %p63 = scmp.ne.s32.totalorder %s52, %s53
      %p64 = scmp.eq.s32.totalorder %s18, 0
      %p65 = por %p63, %p64
      %p66 = scmp.ne.s32.totalorder %s52, %s53
      %p67 = scmp.eq.s32.totalorder %s19, 1
      %p68 = por %p66, %p67
      %p70 = scmp.ne.s32.totalorder %s53, %s69
      %p71 = scmp.eq.s32.totalorder %s19, 0
      %p72 = por %p70, %p71
      %p73 = scmp.le.s32.totalorder 1, %s13
      %p74 = scmp.lt.s32.totalorder %s13, 3
      %p75 = pnand %p73, %p74
      %p76 = pneg %p75
      // Predicated region
      $region9: #{tpu_custom_call.1} parent=5 // pred_check
        _
      $region10: #{tpu_custom_call.1} parent=5 // pred_check_branch
        %78 = sbr.rel (%p75) target = $region12
      $region11: #{tpu_custom_call.1} parent=5 // pred_region
        %s79 = ssub.s32 %s13, 1
      $region12: #{tpu_custom_call.1} parent=5 // pred_fallthru
        _
      %p80 = scmp.lt.s32.totalorder %s13, 2
      // Predicated region
      $region13: #{tpu_custom_call.1} parent=5 // pred_check
        %p81 = pneg %p80
      $region14: #{tpu_custom_call.1} parent=5 // pred_check_branch
        %83 = sbr.rel (%p81) target = $region16
      $region15: #{tpu_custom_call.1} parent=5 // pred_region
        // Predicated region
        $region17: #{tpu_custom_call.1} parent=15 // pred_check
          %p84 = pneg %p33
        $region18: #{tpu_custom_call.1} parent=15 // pred_check_branch
          %86 = sbr.rel (%p84) target = $region20
        $region19: #{tpu_custom_call.1} parent=15 // pred_region
          %s87 = sand.u32 %s23, 1
          %s88 = scalar_lea.sflag [#allocation3], %s87
          %s89 = sand.u32 %s23, 1
          %s90 = smul.addr %s89, 4096
          %s91 = scalar_lea.vmem [#allocation2], %s90
          %s92 = smul.u32 32, %s13
          %94 = vsyncadd %s88, 0
          %s95 = smul.addr %s92, 16
          %s96 = smul.addr %s95, 8
          %s97 = scalar_lea.hbm %s0, %s96
          %s98 = sshll.u32 %s97, 4
          %s99 = int_to_ptr.hbm [resolvable:$true] %s98
          %s100 = sshll.u32 %s91, 4
          %s101 = int_to_ptr.vmem [resolvable:$true] %s100
          %106 = dma.hbm_to_vmem [thread:$0]  %s99, 65536, %s101, %s88, 2048, 2048, 128
        $region20: #{tpu_custom_call.1} parent=15 // pred_fallthru
          _
      $region16: #{tpu_custom_call.1} parent=5 // pred_fallthru
        _
      %p107 = scmp.le.s32.totalorder 1, %s13
      %p108 = scmp.lt.s32.totalorder %s13, 3
      %p109 = pnand %p107, %p108
      %p110 = pneg %p109
      // Predicated region
      $region21: #{tpu_custom_call.1} parent=5 // pred_check
        _
      $region22: #{tpu_custom_call.1} parent=5 // pred_check_branch
        %112 = sbr.rel (%p109) target = $region24
      $region23: #{tpu_custom_call.1} parent=5 // pred_region
        %s113 = ssub.s32 %s13, 1
        %s114 = sand.u32 %s26, 1
        %s115 = scalar_lea.sflag [#allocation3], %s114
        %s116 = sand.u32 %s26, 1
        %s117 = smul.addr %s116, 4096
        %s118 = scalar_lea.vmem [#allocation2], %s117
        // Predicated region
        $region25: #{tpu_custom_call.1} parent=23 // pred_check
          %p119 = pneg %p39
        $region26: #{tpu_custom_call.1} parent=23 // pred_check_branch
          %121 = sbr.rel (%p119) target = $region28
        $region27: #{tpu_custom_call.1} parent=23 // pred_region
          %123 = dma.done %s115, 65536
        $region28: #{tpu_custom_call.1} parent=23 // pred_fallthru
          _
        %s124 = sand.u32 %s26, 1
        %s125 = scalar_lea.sflag [#allocation3], %s124
        %s126 = sand.u32 %s26, 1
        %s127 = smul.addr %s126, 4096
        %s128 = scalar_lea.vmem [#allocation2], %s127
        %p129 = pneg %p39
        %p130 = pneg %p36
        %p131 = pneg %p65
        %p132 = pneg %p62
        %s133 = sand.u32 %s52, 1
        %s134 = scalar_lea.sflag [#allocation4], %s133
        %s135 = sand.u32 %s52, 1
        %s136 = smul.addr %s135, 4096
        %s137 = scalar_lea.vmem [#allocation5], %s136
        %s138 = smul.u32 32, %s18
        %s139 = smul.u32 32, %s18
        %v140 = vld [vmem:[%s118] sm:$0xff]
        %v141 = vld [vmem:[%s118 + $0x8] sm:$0xff]
        %v142 = vld [vmem:[%s118 + $0x10] sm:$0xff]
        %v143 = vld [vmem:[%s118 + $0x18] sm:$0xff]
        %v144 = vld [vmem:[%s118 + $0x20] sm:$0xff]
        %v145 = vld [vmem:[%s118 + $0x28] sm:$0xff]
        %v146 = vld [vmem:[%s118 + $0x30] sm:$0xff]
        %v147 = vld [vmem:[%s118 + $0x38] sm:$0xff]
        %v148 = vld [vmem:[%s118 + $0x40] sm:$0xff]
        %v149 = vld [vmem:[%s118 + $0x48] sm:$0xff]
        %v150 = vld [vmem:[%s118 + $0x50] sm:$0xff]
        %v151 = vld [vmem:[%s118 + $0x58] sm:$0xff]
        %v152 = vld [vmem:[%s118 + $0x60] sm:$0xff]
        %v153 = vld [vmem:[%s118 + $0x68] sm:$0xff]
        %v154 = vld [vmem:[%s118 + $0x70] sm:$0xff]
        %v155 = vld [vmem:[%s118 + $0x78] sm:$0xff]
        %v156 = vld [vmem:[%s118 + $0x80] sm:$0xff]
        %v157 = vld [vmem:[%s118 + $0x88] sm:$0xff]
        %v158 = vld [vmem:[%s118 + $0x90] sm:$0xff]
        %v159 = vld [vmem:[%s118 + $0x98] sm:$0xff]
        %v160 = vld [vmem:[%s118 + $0xa0] sm:$0xff]
        %v161 = vld [vmem:[%s118 + $0xa8] sm:$0xff]
        %v162 = vld [vmem:[%s118 + $0xb0] sm:$0xff]
        %v163 = vld [vmem:[%s118 + $0xb8] sm:$0xff]
        %v164 = vld [vmem:[%s118 + $0xc0] sm:$0xff]
        %v165 = vld [vmem:[%s118 + $0xc8] sm:$0xff]
        %v166 = vld [vmem:[%s118 + $0xd0] sm:$0xff]
        %v167 = vld [vmem:[%s118 + $0xd8] sm:$0xff]
        %v168 = vld [vmem:[%s118 + $0xe0] sm:$0xff]
        %v169 = vld [vmem:[%s118 + $0xe8] sm:$0xff]
        %v170 = vld [vmem:[%s118 + $0xf0] sm:$0xff]
        %v171 = vld [vmem:[%s118 + $0xf8] sm:$0xff]
        %v172 = vld [vmem:[%s118 + $0x100] sm:$0xff]
        %v173 = vld [vmem:[%s118 + $0x108] sm:$0xff]
        %v174 = vld [vmem:[%s118 + $0x110] sm:$0xff]
        %v175 = vld [vmem:[%s118 + $0x118] sm:$0xff]
        %v176 = vld [vmem:[%s118 + $0x120] sm:$0xff]
        %v177 = vld [vmem:[%s118 + $0x128] sm:$0xff]
        %v178 = vld [vmem:[%s118 + $0x130] sm:$0xff]
        %v179 = vld [vmem:[%s118 + $0x138] sm:$0xff]
        %v180 = vld [vmem:[%s118 + $0x140] sm:$0xff]
        %v181 = vld [vmem:[%s118 + $0x148] sm:$0xff]
        %v182 = vld [vmem:[%s118 + $0x150] sm:$0xff]
        %v183 = vld [vmem:[%s118 + $0x158] sm:$0xff]
        %v184 = vld [vmem:[%s118 + $0x160] sm:$0xff]
        %v185 = vld [vmem:[%s118 + $0x168] sm:$0xff]
        %v186 = vld [vmem:[%s118 + $0x170] sm:$0xff]
        %v187 = vld [vmem:[%s118 + $0x178] sm:$0xff]
        %v188 = vld [vmem:[%s118 + $0x180] sm:$0xff]
        %v189 = vld [vmem:[%s118 + $0x188] sm:$0xff]
        %v190 = vld [vmem:[%s118 + $0x190] sm:$0xff]
        %v191 = vld [vmem:[%s118 + $0x198] sm:$0xff]
        %v192 = vld [vmem:[%s118 + $0x1a0] sm:$0xff]
        %v193 = vld [vmem:[%s118 + $0x1a8] sm:$0xff]
        %v194 = vld [vmem:[%s118 + $0x1b0] sm:$0xff]
        %v195 = vld [vmem:[%s118 + $0x1b8] sm:$0xff]
        %v196 = vld [vmem:[%s118 + $0x1c0] sm:$0xff]
        %v197 = vld [vmem:[%s118 + $0x1c8] sm:$0xff]
        %v198 = vld [vmem:[%s118 + $0x1d0] sm:$0xff]
        %v199 = vld [vmem:[%s118 + $0x1d8] sm:$0xff]
        %v200 = vld [vmem:[%s118 + $0x1e0] sm:$0xff]
        %v201 = vld [vmem:[%s118 + $0x1e8] sm:$0xff]
        %v202 = vld [vmem:[%s118 + $0x1f0] sm:$0xff]
        %v203 = vld [vmem:[%s118 + $0x1f8] sm:$0xff]
        %v204 = vld [vmem:[%s118 + $0x200] sm:$0xff]
        %v205 = vld [vmem:[%s118 + $0x208] sm:$0xff]
        %v206 = vld [vmem:[%s118 + $0x210] sm:$0xff]
        %v207 = vld [vmem:[%s118 + $0x218] sm:$0xff]
        %v208 = vld [vmem:[%s118 + $0x220] sm:$0xff]
        %v209 = vld [vmem:[%s118 + $0x228] sm:$0xff]
        %v210 = vld [vmem:[%s118 + $0x230] sm:$0xff]
        %v211 = vld [vmem:[%s118 + $0x238] sm:$0xff]
        %v212 = vld [vmem:[%s118 + $0x240] sm:$0xff]
        %v213 = vld [vmem:[%s118 + $0x248] sm:$0xff]
        %v214 = vld [vmem:[%s118 + $0x250] sm:$0xff]
        %v215 = vld [vmem:[%s118 + $0x258] sm:$0xff]
        %v216 = vld [vmem:[%s118 + $0x260] sm:$0xff]
        %v217 = vld [vmem:[%s118 + $0x268] sm:$0xff]
        %v218 = vld [vmem:[%s118 + $0x270] sm:$0xff]
        %v219 = vld [vmem:[%s118 + $0x278] sm:$0xff]
        %v220 = vld [vmem:[%s118 + $0x280] sm:$0xff]
        %v221 = vld [vmem:[%s118 + $0x288] sm:$0xff]
        %v222 = vld [vmem:[%s118 + $0x290] sm:$0xff]
        %v223 = vld [vmem:[%s118 + $0x298] sm:$0xff]
        %v224 = vld [vmem:[%s118 + $0x2a0] sm:$0xff]
        %v225 = vld [vmem:[%s118 + $0x2a8] sm:$0xff]
        %v226 = vld [vmem:[%s118 + $0x2b0] sm:$0xff]
        %v227 = vld [vmem:[%s118 + $0x2b8] sm:$0xff]
        %v228 = vld [vmem:[%s118 + $0x2c0] sm:$0xff]
        %v229 = vld [vmem:[%s118 + $0x2c8] sm:$0xff]
        %v230 = vld [vmem:[%s118 + $0x2d0] sm:$0xff]
        %v231 = vld [vmem:[%s118 + $0x2d8] sm:$0xff]
        %v232 = vld [vmem:[%s118 + $0x2e0] sm:$0xff]
        %v233 = vld [vmem:[%s118 + $0x2e8] sm:$0xff]
        %v234 = vld [vmem:[%s118 + $0x2f0] sm:$0xff]
        %v235 = vld [vmem:[%s118 + $0x2f8] sm:$0xff]
        %v236 = vld [vmem:[%s118 + $0x300] sm:$0xff]
        %v237 = vld [vmem:[%s118 + $0x308] sm:$0xff]
        %v238 = vld [vmem:[%s118 + $0x310] sm:$0xff]
        %v239 = vld [vmem:[%s118 + $0x318] sm:$0xff]
        %v240 = vld [vmem:[%s118 + $0x320] sm:$0xff]
        %v241 = vld [vmem:[%s118 + $0x328] sm:$0xff]
        %v242 = vld [vmem:[%s118 + $0x330] sm:$0xff]
        %v243 = vld [vmem:[%s118 + $0x338] sm:$0xff]
        %v244 = vld [vmem:[%s118 + $0x340] sm:$0xff]
        %v245 = vld [vmem:[%s118 + $0x348] sm:$0xff]
        %v246 = vld [vmem:[%s118 + $0x350] sm:$0xff]
        %v247 = vld [vmem:[%s118 + $0x358] sm:$0xff]
        %v248 = vld [vmem:[%s118 + $0x360] sm:$0xff]
        %v249 = vld [vmem:[%s118 + $0x368] sm:$0xff]
        %v250 = vld [vmem:[%s118 + $0x370] sm:$0xff]
        %v251 = vld [vmem:[%s118 + $0x378] sm:$0xff]
        %v252 = vld [vmem:[%s118 + $0x380] sm:$0xff]
        %v253 = vld [vmem:[%s118 + $0x388] sm:$0xff]
        %v254 = vld [vmem:[%s118 + $0x390] sm:$0xff]
        %v255 = vld [vmem:[%s118 + $0x398] sm:$0xff]
        %v256 = vld [vmem:[%s118 + $0x3a0] sm:$0xff]
        %v257 = vld [vmem:[%s118 + $0x3a8] sm:$0xff]
        %v258 = vld [vmem:[%s118 + $0x3b0] sm:$0xff]
        %v259 = vld [vmem:[%s118 + $0x3b8] sm:$0xff]
        %v260 = vld [vmem:[%s118 + $0x3c0] sm:$0xff]
        %v261 = vld [vmem:[%s118 + $0x3c8] sm:$0xff]
        %v262 = vld [vmem:[%s118 + $0x3d0] sm:$0xff]
        %v263 = vld [vmem:[%s118 + $0x3d8] sm:$0xff]
        %v264 = vld [vmem:[%s118 + $0x3e0] sm:$0xff]
        %v265 = vld [vmem:[%s118 + $0x3e8] sm:$0xff]
        %v266 = vld [vmem:[%s118 + $0x3f0] sm:$0xff]
        %v267 = vld [vmem:[%s118 + $0x3f8] sm:$0xff]
        %v268 = vld [vmem:[%s118 + $0x400] sm:$0xff]
        %v269 = vld [vmem:[%s118 + $0x408] sm:$0xff]
        %v270 = vld [vmem:[%s118 + $0x410] sm:$0xff]
        %v271 = vld [vmem:[%s118 + $0x418] sm:$0xff]
        %v272 = vld [vmem:[%s118 + $0x420] sm:$0xff]
        %v273 = vld [vmem:[%s118 + $0x428] sm:$0xff]
        %v274 = vld [vmem:[%s118 + $0x430] sm:$0xff]
        %v275 = vld [vmem:[%s118 + $0x438] sm:$0xff]
        %v276 = vld [vmem:[%s118 + $0x440] sm:$0xff]
        %v277 = vld [vmem:[%s118 + $0x448] sm:$0xff]
        %v278 = vld [vmem:[%s118 + $0x450] sm:$0xff]
        %v279 = vld [vmem:[%s118 + $0x458] sm:$0xff]
        %v280 = vld [vmem:[%s118 + $0x460] sm:$0xff]
        %v281 = vld [vmem:[%s118 + $0x468] sm:$0xff]
        %v282 = vld [vmem:[%s118 + $0x470] sm:$0xff]
        %v283 = vld [vmem:[%s118 + $0x478] sm:$0xff]
        %v284 = vld [vmem:[%s118 + $0x480] sm:$0xff]
        %v285 = vld [vmem:[%s118 + $0x488] sm:$0xff]
        %v286 = vld [vmem:[%s118 + $0x490] sm:$0xff]
        %v287 = vld [vmem:[%s118 + $0x498] sm:$0xff]
        %v288 = vld [vmem:[%s118 + $0x4a0] sm:$0xff]
        %v289 = vld [vmem:[%s118 + $0x4a8] sm:$0xff]
        %v290 = vld [vmem:[%s118 + $0x4b0] sm:$0xff]
        %v291 = vld [vmem:[%s118 + $0x4b8] sm:$0xff]
        %v292 = vld [vmem:[%s118 + $0x4c0] sm:$0xff]
        %v293 = vld [vmem:[%s118 + $0x4c8] sm:$0xff]
        %v294 = vld [vmem:[%s118 + $0x4d0] sm:$0xff]
        %v295 = vld [vmem:[%s118 + $0x4d8] sm:$0xff]
        %v296 = vld [vmem:[%s118 + $0x4e0] sm:$0xff]
        %v297 = vld [vmem:[%s118 + $0x4e8] sm:$0xff]
        %v298 = vld [vmem:[%s118 + $0x4f0] sm:$0xff]
        %v299 = vld [vmem:[%s118 + $0x4f8] sm:$0xff]
        %v300 = vld [vmem:[%s118 + $0x500] sm:$0xff]
        %v301 = vld [vmem:[%s118 + $0x508] sm:$0xff]
        %v302 = vld [vmem:[%s118 + $0x510] sm:$0xff]
        %v303 = vld [vmem:[%s118 + $0x518] sm:$0xff]
        %v304 = vld [vmem:[%s118 + $0x520] sm:$0xff]
        %v305 = vld [vmem:[%s118 + $0x528] sm:$0xff]
        %v306 = vld [vmem:[%s118 + $0x530] sm:$0xff]
        %v307 = vld [vmem:[%s118 + $0x538] sm:$0xff]
        %v308 = vld [vmem:[%s118 + $0x540] sm:$0xff]
        %v309 = vld [vmem:[%s118 + $0x548] sm:$0xff]
        %v310 = vld [vmem:[%s118 + $0x550] sm:$0xff]
        %v311 = vld [vmem:[%s118 + $0x558] sm:$0xff]
        %v312 = vld [vmem:[%s118 + $0x560] sm:$0xff]
        %v313 = vld [vmem:[%s118 + $0x568] sm:$0xff]
        %v314 = vld [vmem:[%s118 + $0x570] sm:$0xff]
        %v315 = vld [vmem:[%s118 + $0x578] sm:$0xff]
        %v316 = vld [vmem:[%s118 + $0x580] sm:$0xff]
        %v317 = vld [vmem:[%s118 + $0x588] sm:$0xff]
        %v318 = vld [vmem:[%s118 + $0x590] sm:$0xff]
        %v319 = vld [vmem:[%s118 + $0x598] sm:$0xff]
        %v320 = vld [vmem:[%s118 + $0x5a0] sm:$0xff]
        %v321 = vld [vmem:[%s118 + $0x5a8] sm:$0xff]
        %v322 = vld [vmem:[%s118 + $0x5b0] sm:$0xff]
        %v323 = vld [vmem:[%s118 + $0x5b8] sm:$0xff]
        %v324 = vld [vmem:[%s118 + $0x5c0] sm:$0xff]
        %v325 = vld [vmem:[%s118 + $0x5c8] sm:$0xff]
        %v326 = vld [vmem:[%s118 + $0x5d0] sm:$0xff]
        %v327 = vld [vmem:[%s118 + $0x5d8] sm:$0xff]
        %v328 = vld [vmem:[%s118 + $0x5e0] sm:$0xff]
        %v329 = vld [vmem:[%s118 + $0x5e8] sm:$0xff]
        %v330 = vld [vmem:[%s118 + $0x5f0] sm:$0xff]
        %v331 = vld [vmem:[%s118 + $0x5f8] sm:$0xff]
        %v332 = vld [vmem:[%s118 + $0x600] sm:$0xff]
        %v333 = vld [vmem:[%s118 + $0x608] sm:$0xff]
        %v334 = vld [vmem:[%s118 + $0x610] sm:$0xff]
        %v335 = vld [vmem:[%s118 + $0x618] sm:$0xff]
        %v336 = vld [vmem:[%s118 + $0x620] sm:$0xff]
        %v337 = vld [vmem:[%s118 + $0x628] sm:$0xff]
        %v338 = vld [vmem:[%s118 + $0x630] sm:$0xff]
        %v339 = vld [vmem:[%s118 + $0x638] sm:$0xff]
        %v340 = vld [vmem:[%s118 + $0x640] sm:$0xff]
        %v341 = vld [vmem:[%s118 + $0x648] sm:$0xff]
        %v342 = vld [vmem:[%s118 + $0x650] sm:$0xff]
        %v343 = vld [vmem:[%s118 + $0x658] sm:$0xff]
        %v344 = vld [vmem:[%s118 + $0x660] sm:$0xff]
        %v345 = vld [vmem:[%s118 + $0x668] sm:$0xff]
        %v346 = vld [vmem:[%s118 + $0x670] sm:$0xff]
        %v347 = vld [vmem:[%s118 + $0x678] sm:$0xff]
        %v348 = vld [vmem:[%s118 + $0x680] sm:$0xff]
        %v349 = vld [vmem:[%s118 + $0x688] sm:$0xff]
        %v350 = vld [vmem:[%s118 + $0x690] sm:$0xff]
        %v351 = vld [vmem:[%s118 + $0x698] sm:$0xff]
        %v352 = vld [vmem:[%s118 + $0x6a0] sm:$0xff]
        %v353 = vld [vmem:[%s118 + $0x6a8] sm:$0xff]
        %v354 = vld [vmem:[%s118 + $0x6b0] sm:$0xff]
        %v355 = vld [vmem:[%s118 + $0x6b8] sm:$0xff]
        %v356 = vld [vmem:[%s118 + $0x6c0] sm:$0xff]
        %v357 = vld [vmem:[%s118 + $0x6c8] sm:$0xff]
        %v358 = vld [vmem:[%s118 + $0x6d0] sm:$0xff]
        %v359 = vld [vmem:[%s118 + $0x6d8] sm:$0xff]
        %v360 = vld [vmem:[%s118 + $0x6e0] sm:$0xff]
        %v361 = vld [vmem:[%s118 + $0x6e8] sm:$0xff]
        %v362 = vld [vmem:[%s118 + $0x6f0] sm:$0xff]
        %v363 = vld [vmem:[%s118 + $0x6f8] sm:$0xff]
        %v364 = vld [vmem:[%s118 + $0x700] sm:$0xff]
        %v365 = vld [vmem:[%s118 + $0x708] sm:$0xff]
        %v366 = vld [vmem:[%s118 + $0x710] sm:$0xff]
        %v367 = vld [vmem:[%s118 + $0x718] sm:$0xff]
        %v368 = vld [vmem:[%s118 + $0x720] sm:$0xff]
        %v369 = vld [vmem:[%s118 + $0x728] sm:$0xff]
        %v370 = vld [vmem:[%s118 + $0x730] sm:$0xff]
        %v371 = vld [vmem:[%s118 + $0x738] sm:$0xff]
        %v372 = vld [vmem:[%s118 + $0x740] sm:$0xff]
        %v373 = vld [vmem:[%s118 + $0x748] sm:$0xff]
        %v374 = vld [vmem:[%s118 + $0x750] sm:$0xff]
        %v375 = vld [vmem:[%s118 + $0x758] sm:$0xff]
        %v376 = vld [vmem:[%s118 + $0x760] sm:$0xff]
        %v377 = vld [vmem:[%s118 + $0x768] sm:$0xff]
        %v378 = vld [vmem:[%s118 + $0x770] sm:$0xff]
        %v379 = vld [vmem:[%s118 + $0x778] sm:$0xff]
        %v380 = vld [vmem:[%s118 + $0x780] sm:$0xff]
        %v381 = vld [vmem:[%s118 + $0x788] sm:$0xff]
        %v382 = vld [vmem:[%s118 + $0x790] sm:$0xff]
        %v383 = vld [vmem:[%s118 + $0x798] sm:$0xff]
        %v384 = vld [vmem:[%s118 + $0x7a0] sm:$0xff]
        %v385 = vld [vmem:[%s118 + $0x7a8] sm:$0xff]
        %v386 = vld [vmem:[%s118 + $0x7b0] sm:$0xff]
        %v387 = vld [vmem:[%s118 + $0x7b8] sm:$0xff]
        %v388 = vld [vmem:[%s118 + $0x7c0] sm:$0xff]
        %v389 = vld [vmem:[%s118 + $0x7c8] sm:$0xff]
        %v390 = vld [vmem:[%s118 + $0x7d0] sm:$0xff]
        %v391 = vld [vmem:[%s118 + $0x7d8] sm:$0xff]
        %v392 = vld [vmem:[%s118 + $0x7e0] sm:$0xff]
        %v393 = vld [vmem:[%s118 + $0x7e8] sm:$0xff]
        %v394 = vld [vmem:[%s118 + $0x7f0] sm:$0xff]
        %v395 = vld [vmem:[%s118 + $0x7f8] sm:$0xff]
        %v396 = vld [vmem:[%s118 + $0x800] sm:$0xff]
        %v397 = vld [vmem:[%s118 + $0x808] sm:$0xff]
        %v398 = vld [vmem:[%s118 + $0x810] sm:$0xff]
        %v399 = vld [vmem:[%s118 + $0x818] sm:$0xff]
        %v400 = vld [vmem:[%s118 + $0x820] sm:$0xff]
        %v401 = vld [vmem:[%s118 + $0x828] sm:$0xff]
        %v402 = vld [vmem:[%s118 + $0x830] sm:$0xff]
        %v403 = vld [vmem:[%s118 + $0x838] sm:$0xff]
        %v404 = vld [vmem:[%s118 + $0x840] sm:$0xff]
        %v405 = vld [vmem:[%s118 + $0x848] sm:$0xff]
        %v406 = vld [vmem:[%s118 + $0x850] sm:$0xff]
        %v407 = vld [vmem:[%s118 + $0x858] sm:$0xff]
        %v408 = vld [vmem:[%s118 + $0x860] sm:$0xff]
        %v409 = vld [vmem:[%s118 + $0x868] sm:$0xff]
        %v410 = vld [vmem:[%s118 + $0x870] sm:$0xff]
        %v411 = vld [vmem:[%s118 + $0x878] sm:$0xff]
        %v412 = vld [vmem:[%s118 + $0x880] sm:$0xff]
        %v413 = vld [vmem:[%s118 + $0x888] sm:$0xff]
        %v414 = vld [vmem:[%s118 + $0x890] sm:$0xff]
        %v415 = vld [vmem:[%s118 + $0x898] sm:$0xff]
        %v416 = vld [vmem:[%s118 + $0x8a0] sm:$0xff]
        %v417 = vld [vmem:[%s118 + $0x8a8] sm:$0xff]
        %v418 = vld [vmem:[%s118 + $0x8b0] sm:$0xff]
        %v419 = vld [vmem:[%s118 + $0x8b8] sm:$0xff]
        %v420 = vld [vmem:[%s118 + $0x8c0] sm:$0xff]
        %v421 = vld [vmem:[%s118 + $0x8c8] sm:$0xff]
        %v422 = vld [vmem:[%s118 + $0x8d0] sm:$0xff]
        %v423 = vld [vmem:[%s118 + $0x8d8] sm:$0xff]
        %v424 = vld [vmem:[%s118 + $0x8e0] sm:$0xff]
        %v425 = vld [vmem:[%s118 + $0x8e8] sm:$0xff]
        %v426 = vld [vmem:[%s118 + $0x8f0] sm:$0xff]
        %v427 = vld [vmem:[%s118 + $0x8f8] sm:$0xff]
        %v428 = vld [vmem:[%s118 + $0x900] sm:$0xff]
        %v429 = vld [vmem:[%s118 + $0x908] sm:$0xff]
        %v430 = vld [vmem:[%s118 + $0x910] sm:$0xff]
        %v431 = vld [vmem:[%s118 + $0x918] sm:$0xff]
        %v432 = vld [vmem:[%s118 + $0x920] sm:$0xff]
        %v433 = vld [vmem:[%s118 + $0x928] sm:$0xff]
        %v434 = vld [vmem:[%s118 + $0x930] sm:$0xff]
        %v435 = vld [vmem:[%s118 + $0x938] sm:$0xff]
        %v436 = vld [vmem:[%s118 + $0x940] sm:$0xff]
        %v437 = vld [vmem:[%s118 + $0x948] sm:$0xff]
        %v438 = vld [vmem:[%s118 + $0x950] sm:$0xff]
        %v439 = vld [vmem:[%s118 + $0x958] sm:$0xff]
        %v440 = vld [vmem:[%s118 + $0x960] sm:$0xff]
        %v441 = vld [vmem:[%s118 + $0x968] sm:$0xff]
        %v442 = vld [vmem:[%s118 + $0x970] sm:$0xff]
        %v443 = vld [vmem:[%s118 + $0x978] sm:$0xff]
        %v444 = vld [vmem:[%s118 + $0x980] sm:$0xff]
        %v445 = vld [vmem:[%s118 + $0x988] sm:$0xff]
        %v446 = vld [vmem:[%s118 + $0x990] sm:$0xff]
        %v447 = vld [vmem:[%s118 + $0x998] sm:$0xff]
        %v448 = vld [vmem:[%s118 + $0x9a0] sm:$0xff]
        %v449 = vld [vmem:[%s118 + $0x9a8] sm:$0xff]
        %v450 = vld [vmem:[%s118 + $0x9b0] sm:$0xff]
        %v451 = vld [vmem:[%s118 + $0x9b8] sm:$0xff]
        %v452 = vld [vmem:[%s118 + $0x9c0] sm:$0xff]
        %v453 = vld [vmem:[%s118 + $0x9c8] sm:$0xff]
        %v454 = vld [vmem:[%s118 + $0x9d0] sm:$0xff]
        %v455 = vld [vmem:[%s118 + $0x9d8] sm:$0xff]
        %v456 = vld [vmem:[%s118 + $0x9e0] sm:$0xff]
        %v457 = vld [vmem:[%s118 + $0x9e8] sm:$0xff]
        %v458 = vld [vmem:[%s118 + $0x9f0] sm:$0xff]
        %v459 = vld [vmem:[%s118 + $0x9f8] sm:$0xff]
        %v460 = vld [vmem:[%s118 + $0xa00] sm:$0xff]
        %v461 = vld [vmem:[%s118 + $0xa08] sm:$0xff]
        %v462 = vld [vmem:[%s118 + $0xa10] sm:$0xff]
        %v463 = vld [vmem:[%s118 + $0xa18] sm:$0xff]
        %v464 = vld [vmem:[%s118 + $0xa20] sm:$0xff]
        %v465 = vld [vmem:[%s118 + $0xa28] sm:$0xff]
        %v466 = vld [vmem:[%s118 + $0xa30] sm:$0xff]
        %v467 = vld [vmem:[%s118 + $0xa38] sm:$0xff]
        %v468 = vld [vmem:[%s118 + $0xa40] sm:$0xff]
        %v469 = vld [vmem:[%s118 + $0xa48] sm:$0xff]
        %v470 = vld [vmem:[%s118 + $0xa50] sm:$0xff]
        %v471 = vld [vmem:[%s118 + $0xa58] sm:$0xff]
        %v472 = vld [vmem:[%s118 + $0xa60] sm:$0xff]
        %v473 = vld [vmem:[%s118 + $0xa68] sm:$0xff]
        %v474 = vld [vmem:[%s118 + $0xa70] sm:$0xff]
        %v475 = vld [vmem:[%s118 + $0xa78] sm:$0xff]
        %v476 = vld [vmem:[%s118 + $0xa80] sm:$0xff]
        %v477 = vld [vmem:[%s118 + $0xa88] sm:$0xff]
        %v478 = vld [vmem:[%s118 + $0xa90] sm:$0xff]
        %v479 = vld [vmem:[%s118 + $0xa98] sm:$0xff]
        %v480 = vld [vmem:[%s118 + $0xaa0] sm:$0xff]
        %v481 = vld [vmem:[%s118 + $0xaa8] sm:$0xff]
        %v482 = vld [vmem:[%s118 + $0xab0] sm:$0xff]
        %v483 = vld [vmem:[%s118 + $0xab8] sm:$0xff]
        %v484 = vld [vmem:[%s118 + $0xac0] sm:$0xff]
        %v485 = vld [vmem:[%s118 + $0xac8] sm:$0xff]
        %v486 = vld [vmem:[%s118 + $0xad0] sm:$0xff]
        %v487 = vld [vmem:[%s118 + $0xad8] sm:$0xff]
        %v488 = vld [vmem:[%s118 + $0xae0] sm:$0xff]
        %v489 = vld [vmem:[%s118 + $0xae8] sm:$0xff]
        %v490 = vld [vmem:[%s118 + $0xaf0] sm:$0xff]
        %v491 = vld [vmem:[%s118 + $0xaf8] sm:$0xff]
        %v492 = vld [vmem:[%s118 + $0xb00] sm:$0xff]
        %v493 = vld [vmem:[%s118 + $0xb08] sm:$0xff]
        %v494 = vld [vmem:[%s118 + $0xb10] sm:$0xff]
        %v495 = vld [vmem:[%s118 + $0xb18] sm:$0xff]
        %v496 = vld [vmem:[%s118 + $0xb20] sm:$0xff]
        %v497 = vld [vmem:[%s118 + $0xb28] sm:$0xff]
        %v498 = vld [vmem:[%s118 + $0xb30] sm:$0xff]
        %v499 = vld [vmem:[%s118 + $0xb38] sm:$0xff]
        %v500 = vld [vmem:[%s118 + $0xb40] sm:$0xff]
        %v501 = vld [vmem:[%s118 + $0xb48] sm:$0xff]
        %v502 = vld [vmem:[%s118 + $0xb50] sm:$0xff]
        %v503 = vld [vmem:[%s118 + $0xb58] sm:$0xff]
        %v504 = vld [vmem:[%s118 + $0xb60] sm:$0xff]
        %v505 = vld [vmem:[%s118 + $0xb68] sm:$0xff]
        %v506 = vld [vmem:[%s118 + $0xb70] sm:$0xff]
        %v507 = vld [vmem:[%s118 + $0xb78] sm:$0xff]
        %v508 = vld [vmem:[%s118 + $0xb80] sm:$0xff]
        %v509 = vld [vmem:[%s118 + $0xb88] sm:$0xff]
        %v510 = vld [vmem:[%s118 + $0xb90] sm:$0xff]
        %v511 = vld [vmem:[%s118 + $0xb98] sm:$0xff]
        %v512 = vld [vmem:[%s118 + $0xba0] sm:$0xff]
        %v513 = vld [vmem:[%s118 + $0xba8] sm:$0xff]
        %v514 = vld [vmem:[%s118 + $0xbb0] sm:$0xff]
        %v515 = vld [vmem:[%s118 + $0xbb8] sm:$0xff]
        %v516 = vld [vmem:[%s118 + $0xbc0] sm:$0xff]
        %v517 = vld [vmem:[%s118 + $0xbc8] sm:$0xff]
        %v518 = vld [vmem:[%s118 + $0xbd0] sm:$0xff]
        %v519 = vld [vmem:[%s118 + $0xbd8] sm:$0xff]
        %v520 = vld [vmem:[%s118 + $0xbe0] sm:$0xff]
        %v521 = vld [vmem:[%s118 + $0xbe8] sm:$0xff]
        %v522 = vld [vmem:[%s118 + $0xbf0] sm:$0xff]
        %v523 = vld [vmem:[%s118 + $0xbf8] sm:$0xff]
        %v524 = vld [vmem:[%s118 + $0xc00] sm:$0xff]
        %v525 = vld [vmem:[%s118 + $0xc08] sm:$0xff]
        %v526 = vld [vmem:[%s118 + $0xc10] sm:$0xff]
        %v527 = vld [vmem:[%s118 + $0xc18] sm:$0xff]
        %v528 = vld [vmem:[%s118 + $0xc20] sm:$0xff]
        %v529 = vld [vmem:[%s118 + $0xc28] sm:$0xff]
        %v530 = vld [vmem:[%s118 + $0xc30] sm:$0xff]
        %v531 = vld [vmem:[%s118 + $0xc38] sm:$0xff]
        %v532 = vld [vmem:[%s118 + $0xc40] sm:$0xff]
        %v533 = vld [vmem:[%s118 + $0xc48] sm:$0xff]
        %v534 = vld [vmem:[%s118 + $0xc50] sm:$0xff]
        %v535 = vld [vmem:[%s118 + $0xc58] sm:$0xff]
        %v536 = vld [vmem:[%s118 + $0xc60] sm:$0xff]
        %v537 = vld [vmem:[%s118 + $0xc68] sm:$0xff]
        %v538 = vld [vmem:[%s118 + $0xc70] sm:$0xff]
        %v539 = vld [vmem:[%s118 + $0xc78] sm:$0xff]
        %v540 = vld [vmem:[%s118 + $0xc80] sm:$0xff]
        %v541 = vld [vmem:[%s118 + $0xc88] sm:$0xff]
        %v542 = vld [vmem:[%s118 + $0xc90] sm:$0xff]
        %v543 = vld [vmem:[%s118 + $0xc98] sm:$0xff]
        %v544 = vld [vmem:[%s118 + $0xca0] sm:$0xff]
        %v545 = vld [vmem:[%s118 + $0xca8] sm:$0xff]
        %v546 = vld [vmem:[%s118 + $0xcb0] sm:$0xff]
        %v547 = vld [vmem:[%s118 + $0xcb8] sm:$0xff]
        %v548 = vld [vmem:[%s118 + $0xcc0] sm:$0xff]
        %v549 = vld [vmem:[%s118 + $0xcc8] sm:$0xff]
        %v550 = vld [vmem:[%s118 + $0xcd0] sm:$0xff]
        %v551 = vld [vmem:[%s118 + $0xcd8] sm:$0xff]
        %v552 = vld [vmem:[%s118 + $0xce0] sm:$0xff]
        %v553 = vld [vmem:[%s118 + $0xce8] sm:$0xff]
        %v554 = vld [vmem:[%s118 + $0xcf0] sm:$0xff]
        %v555 = vld [vmem:[%s118 + $0xcf8] sm:$0xff]
        %v556 = vld [vmem:[%s118 + $0xd00] sm:$0xff]
        %v557 = vld [vmem:[%s118 + $0xd08] sm:$0xff]
        %v558 = vld [vmem:[%s118 + $0xd10] sm:$0xff]
        %v559 = vld [vmem:[%s118 + $0xd18] sm:$0xff]
        %v560 = vld [vmem:[%s118 + $0xd20] sm:$0xff]
        %v561 = vld [vmem:[%s118 + $0xd28] sm:$0xff]
        %v562 = vld [vmem:[%s118 + $0xd30] sm:$0xff]
        %v563 = vld [vmem:[%s118 + $0xd38] sm:$0xff]
        %v564 = vld [vmem:[%s118 + $0xd40] sm:$0xff]
        %v565 = vld [vmem:[%s118 + $0xd48] sm:$0xff]
        %v566 = vld [vmem:[%s118 + $0xd50] sm:$0xff]
        %v567 = vld [vmem:[%s118 + $0xd58] sm:$0xff]
        %v568 = vld [vmem:[%s118 + $0xd60] sm:$0xff]
        %v569 = vld [vmem:[%s118 + $0xd68] sm:$0xff]
        %v570 = vld [vmem:[%s118 + $0xd70] sm:$0xff]
        %v571 = vld [vmem:[%s118 + $0xd78] sm:$0xff]
        %v572 = vld [vmem:[%s118 + $0xd80] sm:$0xff]
        %v573 = vld [vmem:[%s118 + $0xd88] sm:$0xff]
        %v574 = vld [vmem:[%s118 + $0xd90] sm:$0xff]
        %v575 = vld [vmem:[%s118 + $0xd98] sm:$0xff]
        %v576 = vld [vmem:[%s118 + $0xda0] sm:$0xff]
        %v577 = vld [vmem:[%s118 + $0xda8] sm:$0xff]
        %v578 = vld [vmem:[%s118 + $0xdb0] sm:$0xff]
        %v579 = vld [vmem:[%s118 + $0xdb8] sm:$0xff]
        %v580 = vld [vmem:[%s118 + $0xdc0] sm:$0xff]
        %v581 = vld [vmem:[%s118 + $0xdc8] sm:$0xff]
        %v582 = vld [vmem:[%s118 + $0xdd0] sm:$0xff]
        %v583 = vld [vmem:[%s118 + $0xdd8] sm:$0xff]
        %v584 = vld [vmem:[%s118 + $0xde0] sm:$0xff]
        %v585 = vld [vmem:[%s118 + $0xde8] sm:$0xff]
        %v586 = vld [vmem:[%s118 + $0xdf0] sm:$0xff]
        %v587 = vld [vmem:[%s118 + $0xdf8] sm:$0xff]
        %v588 = vld [vmem:[%s118 + $0xe00] sm:$0xff]
        %v589 = vld [vmem:[%s118 + $0xe08] sm:$0xff]
        %v590 = vld [vmem:[%s118 + $0xe10] sm:$0xff]
        %v591 = vld [vmem:[%s118 + $0xe18] sm:$0xff]
        %v592 = vld [vmem:[%s118 + $0xe20] sm:$0xff]
        %v593 = vld [vmem:[%s118 + $0xe28] sm:$0xff]
        %v594 = vld [vmem:[%s118 + $0xe30] sm:$0xff]
        %v595 = vld [vmem:[%s118 + $0xe38] sm:$0xff]
        %v596 = vld [vmem:[%s118 + $0xe40] sm:$0xff]
        %v597 = vld [vmem:[%s118 + $0xe48] sm:$0xff]
        %v598 = vld [vmem:[%s118 + $0xe50] sm:$0xff]
        %v599 = vld [vmem:[%s118 + $0xe58] sm:$0xff]
        %v600 = vld [vmem:[%s118 + $0xe60] sm:$0xff]
        %v601 = vld [vmem:[%s118 + $0xe68] sm:$0xff]
        %v602 = vld [vmem:[%s118 + $0xe70] sm:$0xff]
        %v603 = vld [vmem:[%s118 + $0xe78] sm:$0xff]
        %v604 = vld [vmem:[%s118 + $0xe80] sm:$0xff]
        %v605 = vld [vmem:[%s118 + $0xe88] sm:$0xff]
        %v606 = vld [vmem:[%s118 + $0xe90] sm:$0xff]
        %v607 = vld [vmem:[%s118 + $0xe98] sm:$0xff]
        %v608 = vld [vmem:[%s118 + $0xea0] sm:$0xff]
        %v609 = vld [vmem:[%s118 + $0xea8] sm:$0xff]
        %v610 = vld [vmem:[%s118 + $0xeb0] sm:$0xff]
        %v611 = vld [vmem:[%s118 + $0xeb8] sm:$0xff]
        %v612 = vld [vmem:[%s118 + $0xec0] sm:$0xff]
        %v613 = vld [vmem:[%s118 + $0xec8] sm:$0xff]
        %v614 = vld [vmem:[%s118 + $0xed0] sm:$0xff]
        %v615 = vld [vmem:[%s118 + $0xed8] sm:$0xff]
        %v616 = vld [vmem:[%s118 + $0xee0] sm:$0xff]
        %v617 = vld [vmem:[%s118 + $0xee8] sm:$0xff]
        %v618 = vld [vmem:[%s118 + $0xef0] sm:$0xff]
        %v619 = vld [vmem:[%s118 + $0xef8] sm:$0xff]
        %v620 = vld [vmem:[%s118 + $0xf00] sm:$0xff]
        %v621 = vld [vmem:[%s118 + $0xf08] sm:$0xff]
        %v622 = vld [vmem:[%s118 + $0xf10] sm:$0xff]
        %v623 = vld [vmem:[%s118 + $0xf18] sm:$0xff]
        %v624 = vld [vmem:[%s118 + $0xf20] sm:$0xff]
        %v625 = vld [vmem:[%s118 + $0xf28] sm:$0xff]
        %v626 = vld [vmem:[%s118 + $0xf30] sm:$0xff]
        %v627 = vld [vmem:[%s118 + $0xf38] sm:$0xff]
        %v628 = vld [vmem:[%s118 + $0xf40] sm:$0xff]
        %v629 = vld [vmem:[%s118 + $0xf48] sm:$0xff]
        %v630 = vld [vmem:[%s118 + $0xf50] sm:$0xff]
        %v631 = vld [vmem:[%s118 + $0xf58] sm:$0xff]
        %v632 = vld [vmem:[%s118 + $0xf60] sm:$0xff]
        %v633 = vld [vmem:[%s118 + $0xf68] sm:$0xff]
        %v634 = vld [vmem:[%s118 + $0xf70] sm:$0xff]
        %v635 = vld [vmem:[%s118 + $0xf78] sm:$0xff]
        %v636 = vld [vmem:[%s118 + $0xf80] sm:$0xff]
        %v637 = vld [vmem:[%s118 + $0xf88] sm:$0xff]
        %v638 = vld [vmem:[%s118 + $0xf90] sm:$0xff]
        %v639 = vld [vmem:[%s118 + $0xf98] sm:$0xff]
        %v640 = vld [vmem:[%s118 + $0xfa0] sm:$0xff]
        %v641 = vld [vmem:[%s118 + $0xfa8] sm:$0xff]
        %v642 = vld [vmem:[%s118 + $0xfb0] sm:$0xff]
        %v643 = vld [vmem:[%s118 + $0xfb8] sm:$0xff]
        %v644 = vld [vmem:[%s118 + $0xfc0] sm:$0xff]
        %v645 = vld [vmem:[%s118 + $0xfc8] sm:$0xff]
        %v646 = vld [vmem:[%s118 + $0xfd0] sm:$0xff]
        %v647 = vld [vmem:[%s118 + $0xfd8] sm:$0xff]
        %v648 = vld [vmem:[%s118 + $0xfe0] sm:$0xff]
        %v649 = vld [vmem:[%s118 + $0xfe8] sm:$0xff]
        %v650 = vld [vmem:[%s118 + $0xff0] sm:$0xff]
        %v651 = vld [vmem:[%s118 + $0xff8] sm:$0xff]
        %v652 = vmax.f32 %v140, -1.0
        %v653 = vmax.f32 %v141, -1.0
        %v654 = vmax.f32 %v142, -1.0
        %v655 = vmax.f32 %v143, -1.0
        %v656 = vmax.f32 %v144, -1.0
        %v657 = vmax.f32 %v145, -1.0
        %v658 = vmax.f32 %v146, -1.0
        %v659 = vmax.f32 %v147, -1.0
        %v660 = vmax.f32 %v148, -1.0
        %v661 = vmax.f32 %v149, -1.0
        %v662 = vmax.f32 %v150, -1.0
        %v663 = vmax.f32 %v151, -1.0
        %v664 = vmax.f32 %v152, -1.0
        %v665 = vmax.f32 %v153, -1.0
        %v666 = vmax.f32 %v154, -1.0
        %v667 = vmax.f32 %v155, -1.0
        %v668 = vmax.f32 %v156, -1.0
        %v669 = vmax.f32 %v157, -1.0
        %v670 = vmax.f32 %v158, -1.0
        %v671 = vmax.f32 %v159, -1.0
        %v672 = vmax.f32 %v160, -1.0
        %v673 = vmax.f32 %v161, -1.0
        %v674 = vmax.f32 %v162, -1.0
        %v675 = vmax.f32 %v163, -1.0
        %v676 = vmax.f32 %v164, -1.0
        %v677 = vmax.f32 %v165, -1.0
        %v678 = vmax.f32 %v166, -1.0
        %v679 = vmax.f32 %v167, -1.0
        %v680 = vmax.f32 %v168, -1.0
        %v681 = vmax.f32 %v169, -1.0
        %v682 = vmax.f32 %v170, -1.0
        %v683 = vmax.f32 %v171, -1.0
        %v684 = vmax.f32 %v172, -1.0
        %v685 = vmax.f32 %v173, -1.0
        %v686 = vmax.f32 %v174, -1.0
        %v687 = vmax.f32 %v175, -1.0
        %v688 = vmax.f32 %v176, -1.0
        %v689 = vmax.f32 %v177, -1.0
        %v690 = vmax.f32 %v178, -1.0
        %v691 = vmax.f32 %v179, -1.0
        %v692 = vmax.f32 %v180, -1.0
        %v693 = vmax.f32 %v181, -1.0
        %v694 = vmax.f32 %v182, -1.0
        %v695 = vmax.f32 %v183, -1.0
        %v696 = vmax.f32 %v184, -1.0
        %v697 = vmax.f32 %v185, -1.0
        %v698 = vmax.f32 %v186, -1.0
        %v699 = vmax.f32 %v187, -1.0
        %v700 = vmax.f32 %v188, -1.0
        %v701 = vmax.f32 %v189, -1.0
        %v702 = vmax.f32 %v190, -1.0
        %v703 = vmax.f32 %v191, -1.0
        %v704 = vmax.f32 %v192, -1.0
        %v705 = vmax.f32 %v193, -1.0
        %v706 = vmax.f32 %v194, -1.0
        %v707 = vmax.f32 %v195, -1.0
        %v708 = vmax.f32 %v196, -1.0
        %v709 = vmax.f32 %v197, -1.0
        %v710 = vmax.f32 %v198, -1.0
        %v711 = vmax.f32 %v199, -1.0
        %v712 = vmax.f32 %v200, -1.0
        %v713 = vmax.f32 %v201, -1.0
        %v714 = vmax.f32 %v202, -1.0
        %v715 = vmax.f32 %v203, -1.0
        %v716 = vmax.f32 %v204, -1.0
        %v717 = vmax.f32 %v205, -1.0
        %v718 = vmax.f32 %v206, -1.0
        %v719 = vmax.f32 %v207, -1.0
        %v720 = vmax.f32 %v208, -1.0
        %v721 = vmax.f32 %v209, -1.0
        %v722 = vmax.f32 %v210, -1.0
        %v723 = vmax.f32 %v211, -1.0
        %v724 = vmax.f32 %v212, -1.0
        %v725 = vmax.f32 %v213, -1.0
        %v726 = vmax.f32 %v214, -1.0
        %v727 = vmax.f32 %v215, -1.0
        %v728 = vmax.f32 %v216, -1.0
        %v729 = vmax.f32 %v217, -1.0
        %v730 = vmax.f32 %v218, -1.0
        %v731 = vmax.f32 %v219, -1.0
        %v732 = vmax.f32 %v220, -1.0
        %v733 = vmax.f32 %v221, -1.0
        %v734 = vmax.f32 %v222, -1.0
        %v735 = vmax.f32 %v223, -1.0
        %v736 = vmax.f32 %v224, -1.0
        %v737 = vmax.f32 %v225, -1.0
        %v738 = vmax.f32 %v226, -1.0
        %v739 = vmax.f32 %v227, -1.0
        %v740 = vmax.f32 %v228, -1.0
        %v741 = vmax.f32 %v229, -1.0
        %v742 = vmax.f32 %v230, -1.0
        %v743 = vmax.f32 %v231, -1.0
        %v744 = vmax.f32 %v232, -1.0
        %v745 = vmax.f32 %v233, -1.0
        %v746 = vmax.f32 %v234, -1.0
        %v747 = vmax.f32 %v235, -1.0
        %v748 = vmax.f32 %v236, -1.0
        %v749 = vmax.f32 %v237, -1.0
        %v750 = vmax.f32 %v238, -1.0
        %v751 = vmax.f32 %v239, -1.0
        %v752 = vmax.f32 %v240, -1.0
        %v753 = vmax.f32 %v241, -1.0
        %v754 = vmax.f32 %v242, -1.0
        %v755 = vmax.f32 %v243, -1.0
        %v756 = vmax.f32 %v244, -1.0
        %v757 = vmax.f32 %v245, -1.0
        %v758 = vmax.f32 %v246, -1.0
        %v759 = vmax.f32 %v247, -1.0
        %v760 = vmax.f32 %v248, -1.0
        %v761 = vmax.f32 %v249, -1.0
        %v762 = vmax.f32 %v250, -1.0
        %v763 = vmax.f32 %v251, -1.0
        %v764 = vmax.f32 %v252, -1.0
        %v765 = vmax.f32 %v253, -1.0
        %v766 = vmax.f32 %v254, -1.0
        %v767 = vmax.f32 %v255, -1.0
        %v768 = vmax.f32 %v256, -1.0
        %v769 = vmax.f32 %v257, -1.0
        %v770 = vmax.f32 %v258, -1.0
        %v771 = vmax.f32 %v259, -1.0
        %v772 = vmax.f32 %v260, -1.0
        %v773 = vmax.f32 %v261, -1.0
        %v774 = vmax.f32 %v262, -1.0
        %v775 = vmax.f32 %v263, -1.0
        %v776 = vmax.f32 %v264, -1.0
        %v777 = vmax.f32 %v265, -1.0
        %v778 = vmax.f32 %v266, -1.0
        %v779 = vmax.f32 %v267, -1.0
        %v780 = vmax.f32 %v268, -1.0
        %v781 = vmax.f32 %v269, -1.0
        %v782 = vmax.f32 %v270, -1.0
        %v783 = vmax.f32 %v271, -1.0
        %v784 = vmax.f32 %v272, -1.0
        %v785 = vmax.f32 %v273, -1.0
        %v786 = vmax.f32 %v274, -1.0
        %v787 = vmax.f32 %v275, -1.0
        %v788 = vmax.f32 %v276, -1.0
        %v789 = vmax.f32 %v277, -1.0
        %v790 = vmax.f32 %v278, -1.0
        %v791 = vmax.f32 %v279, -1.0
        %v792 = vmax.f32 %v280, -1.0
        %v793 = vmax.f32 %v281, -1.0
        %v794 = vmax.f32 %v282, -1.0
        %v795 = vmax.f32 %v283, -1.0
        %v796 = vmax.f32 %v284, -1.0
        %v797 = vmax.f32 %v285, -1.0
        %v798 = vmax.f32 %v286, -1.0
        %v799 = vmax.f32 %v287, -1.0
        %v800 = vmax.f32 %v288, -1.0
        %v801 = vmax.f32 %v289, -1.0
        %v802 = vmax.f32 %v290, -1.0
        %v803 = vmax.f32 %v291, -1.0
        %v804 = vmax.f32 %v292, -1.0
        %v805 = vmax.f32 %v293, -1.0
        %v806 = vmax.f32 %v294, -1.0
        %v807 = vmax.f32 %v295, -1.0
        %v808 = vmax.f32 %v296, -1.0
        %v809 = vmax.f32 %v297, -1.0
        %v810 = vmax.f32 %v298, -1.0
        %v811 = vmax.f32 %v299, -1.0
        %v812 = vmax.f32 %v300, -1.0
        %v813 = vmax.f32 %v301, -1.0
        %v814 = vmax.f32 %v302, -1.0
        %v815 = vmax.f32 %v303, -1.0
        %v816 = vmax.f32 %v304, -1.0
        %v817 = vmax.f32 %v305, -1.0
        %v818 = vmax.f32 %v306, -1.0
        %v819 = vmax.f32 %v307, -1.0
        %v820 = vmax.f32 %v308, -1.0
        %v821 = vmax.f32 %v309, -1.0
        %v822 = vmax.f32 %v310, -1.0
        %v823 = vmax.f32 %v311, -1.0
        %v824 = vmax.f32 %v312, -1.0
        %v825 = vmax.f32 %v313, -1.0
        %v826 = vmax.f32 %v314, -1.0
        %v827 = vmax.f32 %v315, -1.0
        %v828 = vmax.f32 %v316, -1.0
        %v829 = vmax.f32 %v317, -1.0
        %v830 = vmax.f32 %v318, -1.0
        %v831 = vmax.f32 %v319, -1.0
        %v832 = vmax.f32 %v320, -1.0
        %v833 = vmax.f32 %v321, -1.0
        %v834 = vmax.f32 %v322, -1.0
        %v835 = vmax.f32 %v323, -1.0
        %v836 = vmax.f32 %v324, -1.0
        %v837 = vmax.f32 %v325, -1.0
        %v838 = vmax.f32 %v326, -1.0
        %v839 = vmax.f32 %v327, -1.0
        %v840 = vmax.f32 %v328, -1.0
        %v841 = vmax.f32 %v329, -1.0
        %v842 = vmax.f32 %v330, -1.0
        %v843 = vmax.f32 %v331, -1.0
        %v844 = vmax.f32 %v332, -1.0
        %v845 = vmax.f32 %v333, -1.0
        %v846 = vmax.f32 %v334, -1.0
        %v847 = vmax.f32 %v335, -1.0
        %v848 = vmax.f32 %v336, -1.0
        %v849 = vmax.f32 %v337, -1.0
        %v850 = vmax.f32 %v338, -1.0
        %v851 = vmax.f32 %v339, -1.0
        %v852 = vmax.f32 %v340, -1.0
        %v853 = vmax.f32 %v341, -1.0
        %v854 = vmax.f32 %v342, -1.0
        %v855 = vmax.f32 %v343, -1.0
        %v856 = vmax.f32 %v344, -1.0
        %v857 = vmax.f32 %v345, -1.0
        %v858 = vmax.f32 %v346, -1.0
        %v859 = vmax.f32 %v347, -1.0
        %v860 = vmax.f32 %v348, -1.0
        %v861 = vmax.f32 %v349, -1.0
        %v862 = vmax.f32 %v350, -1.0
        %v863 = vmax.f32 %v351, -1.0
        %v864 = vmax.f32 %v352, -1.0
        %v865 = vmax.f32 %v353, -1.0
        %v866 = vmax.f32 %v354, -1.0
        %v867 = vmax.f32 %v355, -1.0
        %v868 = vmax.f32 %v356, -1.0
        %v869 = vmax.f32 %v357, -1.0
        %v870 = vmax.f32 %v358, -1.0
        %v871 = vmax.f32 %v359, -1.0
        %v872 = vmax.f32 %v360, -1.0
        %v873 = vmax.f32 %v361, -1.0
        %v874 = vmax.f32 %v362, -1.0
        %v875 = vmax.f32 %v363, -1.0
        %v876 = vmax.f32 %v364, -1.0
        %v877 = vmax.f32 %v365, -1.0
        %v878 = vmax.f32 %v366, -1.0
        %v879 = vmax.f32 %v367, -1.0
        %v880 = vmax.f32 %v368, -1.0
        %v881 = vmax.f32 %v369, -1.0
        %v882 = vmax.f32 %v370, -1.0
        %v883 = vmax.f32 %v371, -1.0
        %v884 = vmax.f32 %v372, -1.0
        %v885 = vmax.f32 %v373, -1.0
        %v886 = vmax.f32 %v374, -1.0
        %v887 = vmax.f32 %v375, -1.0
        %v888 = vmax.f32 %v376, -1.0
        %v889 = vmax.f32 %v377, -1.0
        %v890 = vmax.f32 %v378, -1.0
        %v891 = vmax.f32 %v379, -1.0
        %v892 = vmax.f32 %v380, -1.0
        %v893 = vmax.f32 %v381, -1.0
        %v894 = vmax.f32 %v382, -1.0
        %v895 = vmax.f32 %v383, -1.0
        %v896 = vmax.f32 %v384, -1.0
        %v897 = vmax.f32 %v385, -1.0
        %v898 = vmax.f32 %v386, -1.0
        %v899 = vmax.f32 %v387, -1.0
        %v900 = vmax.f32 %v388, -1.0
        %v901 = vmax.f32 %v389, -1.0
        %v902 = vmax.f32 %v390, -1.0
        %v903 = vmax.f32 %v391, -1.0
        %v904 = vmax.f32 %v392, -1.0
        %v905 = vmax.f32 %v393, -1.0
        %v906 = vmax.f32 %v394, -1.0
        %v907 = vmax.f32 %v395, -1.0
        %v908 = vmax.f32 %v396, -1.0
        %v909 = vmax.f32 %v397, -1.0
        %v910 = vmax.f32 %v398, -1.0
        %v911 = vmax.f32 %v399, -1.0
        %v912 = vmax.f32 %v400, -1.0
        %v913 = vmax.f32 %v401, -1.0
        %v914 = vmax.f32 %v402, -1.0
        %v915 = vmax.f32 %v403, -1.0
        %v916 = vmax.f32 %v404, -1.0
        %v917 = vmax.f32 %v405, -1.0
        %v918 = vmax.f32 %v406, -1.0
        %v919 = vmax.f32 %v407, -1.0
        %v920 = vmax.f32 %v408, -1.0
        %v921 = vmax.f32 %v409, -1.0
        %v922 = vmax.f32 %v410, -1.0
        %v923 = vmax.f32 %v411, -1.0
        %v924 = vmax.f32 %v412, -1.0
        %v925 = vmax.f32 %v413, -1.0
        %v926 = vmax.f32 %v414, -1.0
        %v927 = vmax.f32 %v415, -1.0
        %v928 = vmax.f32 %v416, -1.0
        %v929 = vmax.f32 %v417, -1.0
        %v930 = vmax.f32 %v418, -1.0
        %v931 = vmax.f32 %v419, -1.0
        %v932 = vmax.f32 %v420, -1.0
        %v933 = vmax.f32 %v421, -1.0
        %v934 = vmax.f32 %v422, -1.0
        %v935 = vmax.f32 %v423, -1.0
        %v936 = vmax.f32 %v424, -1.0
        %v937 = vmax.f32 %v425, -1.0
        %v938 = vmax.f32 %v426, -1.0
        %v939 = vmax.f32 %v427, -1.0
        %v940 = vmax.f32 %v428, -1.0
        %v941 = vmax.f32 %v429, -1.0
        %v942 = vmax.f32 %v430, -1.0
        %v943 = vmax.f32 %v431, -1.0
        %v944 = vmax.f32 %v432, -1.0
        %v945 = vmax.f32 %v433, -1.0
        %v946 = vmax.f32 %v434, -1.0
        %v947 = vmax.f32 %v435, -1.0
        %v948 = vmax.f32 %v436, -1.0
        %v949 = vmax.f32 %v437, -1.0
        %v950 = vmax.f32 %v438, -1.0
        %v951 = vmax.f32 %v439, -1.0
        %v952 = vmax.f32 %v440, -1.0
        %v953 = vmax.f32 %v441, -1.0
        %v954 = vmax.f32 %v442, -1.0
        %v955 = vmax.f32 %v443, -1.0
        %v956 = vmax.f32 %v444, -1.0
        %v957 = vmax.f32 %v445, -1.0
        %v958 = vmax.f32 %v446, -1.0
        %v959 = vmax.f32 %v447, -1.0
        %v960 = vmax.f32 %v448, -1.0
        %v961 = vmax.f32 %v449, -1.0
        %v962 = vmax.f32 %v450, -1.0
        %v963 = vmax.f32 %v451, -1.0
        %v964 = vmax.f32 %v452, -1.0
        %v965 = vmax.f32 %v453, -1.0
        %v966 = vmax.f32 %v454, -1.0
        %v967 = vmax.f32 %v455, -1.0
        %v968 = vmax.f32 %v456, -1.0
        %v969 = vmax.f32 %v457, -1.0
        %v970 = vmax.f32 %v458, -1.0
        %v971 = vmax.f32 %v459, -1.0
        %v972 = vmax.f32 %v460, -1.0
        %v973 = vmax.f32 %v461, -1.0
        %v974 = vmax.f32 %v462, -1.0
        %v975 = vmax.f32 %v463, -1.0
        %v976 = vmax.f32 %v464, -1.0
        %v977 = vmax.f32 %v465, -1.0
        %v978 = vmax.f32 %v466, -1.0
        %v979 = vmax.f32 %v467, -1.0
        %v980 = vmax.f32 %v468, -1.0
        %v981 = vmax.f32 %v469, -1.0
        %v982 = vmax.f32 %v470, -1.0
        %v983 = vmax.f32 %v471, -1.0
        %v984 = vmax.f32 %v472, -1.0
        %v985 = vmax.f32 %v473, -1.0
        %v986 = vmax.f32 %v474, -1.0
        %v987 = vmax.f32 %v475, -1.0
        %v988 = vmax.f32 %v476, -1.0
        %v989 = vmax.f32 %v477, -1.0
        %v990 = vmax.f32 %v478, -1.0
        %v991 = vmax.f32 %v479, -1.0
        %v992 = vmax.f32 %v480, -1.0
        %v993 = vmax.f32 %v481, -1.0
        %v994 = vmax.f32 %v482, -1.0
        %v995 = vmax.f32 %v483, -1.0
        %v996 = vmax.f32 %v484, -1.0
        %v997 = vmax.f32 %v485, -1.0
        %v998 = vmax.f32 %v486, -1.0
        %v999 = vmax.f32 %v487, -1.0
        %v1000 = vmax.f32 %v488, -1.0
        %v1001 = vmax.f32 %v489, -1.0
        %v1002 = vmax.f32 %v490, -1.0
        %v1003 = vmax.f32 %v491, -1.0
        %v1004 = vmax.f32 %v492, -1.0
        %v1005 = vmax.f32 %v493, -1.0
        %v1006 = vmax.f32 %v494, -1.0
        %v1007 = vmax.f32 %v495, -1.0
        %v1008 = vmax.f32 %v496, -1.0
        %v1009 = vmax.f32 %v497, -1.0
        %v1010 = vmax.f32 %v498, -1.0
        %v1011 = vmax.f32 %v499, -1.0
        %v1012 = vmax.f32 %v500, -1.0
        %v1013 = vmax.f32 %v501, -1.0
        %v1014 = vmax.f32 %v502, -1.0
        %v1015 = vmax.f32 %v503, -1.0
        %v1016 = vmax.f32 %v504, -1.0
        %v1017 = vmax.f32 %v505, -1.0
        %v1018 = vmax.f32 %v506, -1.0
        %v1019 = vmax.f32 %v507, -1.0
        %v1020 = vmax.f32 %v508, -1.0
        %v1021 = vmax.f32 %v509, -1.0
        %v1022 = vmax.f32 %v510, -1.0
        %v1023 = vmax.f32 %v511, -1.0
        %v1024 = vmax.f32 %v512, -1.0
        %v1025 = vmax.f32 %v513, -1.0
        %v1026 = vmax.f32 %v514, -1.0
        %v1027 = vmax.f32 %v515, -1.0
        %v1028 = vmax.f32 %v516, -1.0
        %v1029 = vmax.f32 %v517, -1.0
        %v1030 = vmax.f32 %v518, -1.0
        %v1031 = vmax.f32 %v519, -1.0
        %v1032 = vmax.f32 %v520, -1.0
        %v1033 = vmax.f32 %v521, -1.0
        %v1034 = vmax.f32 %v522, -1.0
        %v1035 = vmax.f32 %v523, -1.0
        %v1036 = vmax.f32 %v524, -1.0
        %v1037 = vmax.f32 %v525, -1.0
        %v1038 = vmax.f32 %v526, -1.0
        %v1039 = vmax.f32 %v527, -1.0
        %v1040 = vmax.f32 %v528, -1.0
        %v1041 = vmax.f32 %v529, -1.0
        %v1042 = vmax.f32 %v530, -1.0
        %v1043 = vmax.f32 %v531, -1.0
        %v1044 = vmax.f32 %v532, -1.0
        %v1045 = vmax.f32 %v533, -1.0
        %v1046 = vmax.f32 %v534, -1.0
        %v1047 = vmax.f32 %v535, -1.0
        %v1048 = vmax.f32 %v536, -1.0
        %v1049 = vmax.f32 %v537, -1.0
        %v1050 = vmax.f32 %v538, -1.0
        %v1051 = vmax.f32 %v539, -1.0
        %v1052 = vmax.f32 %v540, -1.0
        %v1053 = vmax.f32 %v541, -1.0
        %v1054 = vmax.f32 %v542, -1.0
        %v1055 = vmax.f32 %v543, -1.0
        %v1056 = vmax.f32 %v544, -1.0
        %v1057 = vmax.f32 %v545, -1.0
        %v1058 = vmax.f32 %v546, -1.0
        %v1059 = vmax.f32 %v547, -1.0
        %v1060 = vmax.f32 %v548, -1.0
        %v1061 = vmax.f32 %v549, -1.0
        %v1062 = vmax.f32 %v550, -1.0
        %v1063 = vmax.f32 %v551, -1.0
        %v1064 = vmax.f32 %v552, -1.0
        %v1065 = vmax.f32 %v553, -1.0
        %v1066 = vmax.f32 %v554, -1.0
        %v1067 = vmax.f32 %v555, -1.0
        %v1068 = vmax.f32 %v556, -1.0
        %v1069 = vmax.f32 %v557, -1.0
        %v1070 = vmax.f32 %v558, -1.0
        %v1071 = vmax.f32 %v559, -1.0
        %v1072 = vmax.f32 %v560, -1.0
        %v1073 = vmax.f32 %v561, -1.0
        %v1074 = vmax.f32 %v562, -1.0
        %v1075 = vmax.f32 %v563, -1.0
        %v1076 = vmax.f32 %v564, -1.0
        %v1077 = vmax.f32 %v565, -1.0
        %v1078 = vmax.f32 %v566, -1.0
        %v1079 = vmax.f32 %v567, -1.0
        %v1080 = vmax.f32 %v568, -1.0
        %v1081 = vmax.f32 %v569, -1.0
        %v1082 = vmax.f32 %v570, -1.0
        %v1083 = vmax.f32 %v571, -1.0
        %v1084 = vmax.f32 %v572, -1.0
        %v1085 = vmax.f32 %v573, -1.0
        %v1086 = vmax.f32 %v574, -1.0
        %v1087 = vmax.f32 %v575, -1.0
        %v1088 = vmax.f32 %v576, -1.0
        %v1089 = vmax.f32 %v577, -1.0
        %v1090 = vmax.f32 %v578, -1.0
        %v1091 = vmax.f32 %v579, -1.0
        %v1092 = vmax.f32 %v580, -1.0
        %v1093 = vmax.f32 %v581, -1.0
        %v1094 = vmax.f32 %v582, -1.0
        %v1095 = vmax.f32 %v583, -1.0
        %v1096 = vmax.f32 %v584, -1.0
        %v1097 = vmax.f32 %v585, -1.0
        %v1098 = vmax.f32 %v586, -1.0
        %v1099 = vmax.f32 %v587, -1.0
        %v1100 = vmax.f32 %v588, -1.0
        %v1101 = vmax.f32 %v589, -1.0
        %v1102 = vmax.f32 %v590, -1.0
        %v1103 = vmax.f32 %v591, -1.0
        %v1104 = vmax.f32 %v592, -1.0
        %v1105 = vmax.f32 %v593, -1.0
        %v1106 = vmax.f32 %v594, -1.0
        %v1107 = vmax.f32 %v595, -1.0
        %v1108 = vmax.f32 %v596, -1.0
        %v1109 = vmax.f32 %v597, -1.0
        %v1110 = vmax.f32 %v598, -1.0
        %v1111 = vmax.f32 %v599, -1.0
        %v1112 = vmax.f32 %v600, -1.0
        %v1113 = vmax.f32 %v601, -1.0
        %v1114 = vmax.f32 %v602, -1.0
        %v1115 = vmax.f32 %v603, -1.0
        %v1116 = vmax.f32 %v604, -1.0
        %v1117 = vmax.f32 %v605, -1.0
        %v1118 = vmax.f32 %v606, -1.0
        %v1119 = vmax.f32 %v607, -1.0
        %v1120 = vmax.f32 %v608, -1.0
        %v1121 = vmax.f32 %v609, -1.0
        %v1122 = vmax.f32 %v610, -1.0
        %v1123 = vmax.f32 %v611, -1.0
        %v1124 = vmax.f32 %v612, -1.0
        %v1125 = vmax.f32 %v613, -1.0
        %v1126 = vmax.f32 %v614, -1.0
        %v1127 = vmax.f32 %v615, -1.0
        %v1128 = vmax.f32 %v616, -1.0
        %v1129 = vmax.f32 %v617, -1.0
        %v1130 = vmax.f32 %v618, -1.0
        %v1131 = vmax.f32 %v619, -1.0
        %v1132 = vmax.f32 %v620, -1.0
        %v1133 = vmax.f32 %v621, -1.0
        %v1134 = vmax.f32 %v622, -1.0
        %v1135 = vmax.f32 %v623, -1.0
        %v1136 = vmax.f32 %v624, -1.0
        %v1137 = vmax.f32 %v625, -1.0
        %v1138 = vmax.f32 %v626, -1.0
        %v1139 = vmax.f32 %v627, -1.0
        %v1140 = vmax.f32 %v628, -1.0
        %v1141 = vmax.f32 %v629, -1.0
        %v1142 = vmax.f32 %v630, -1.0
        %v1143 = vmax.f32 %v631, -1.0
        %v1144 = vmax.f32 %v632, -1.0
        %v1145 = vmax.f32 %v633, -1.0
        %v1146 = vmax.f32 %v634, -1.0
        %v1147 = vmax.f32 %v635, -1.0
        %v1148 = vmax.f32 %v636, -1.0
        %v1149 = vmax.f32 %v637, -1.0
        %v1150 = vmax.f32 %v638, -1.0
        %v1151 = vmax.f32 %v639, -1.0
        %v1152 = vmax.f32 %v640, -1.0
        %v1153 = vmax.f32 %v641, -1.0
        %v1154 = vmax.f32 %v642, -1.0
        %v1155 = vmax.f32 %v643, -1.0
        %v1156 = vmax.f32 %v644, -1.0
        %v1157 = vmax.f32 %v645, -1.0
        %v1158 = vmax.f32 %v646, -1.0
        %v1159 = vmax.f32 %v647, -1.0
        %v1160 = vmax.f32 %v648, -1.0
        %v1161 = vmax.f32 %v649, -1.0
        %v1162 = vmax.f32 %v650, -1.0
        %v1163 = vmax.f32 %v651, -1.0
        %v1164 = vmin.f32 %v652, 1.0
        %v1165 = vmin.f32 %v653, 1.0
        %v1166 = vmin.f32 %v654, 1.0
        %v1167 = vmin.f32 %v655, 1.0
        %v1168 = vmin.f32 %v656, 1.0
        %v1169 = vmin.f32 %v657, 1.0
        %v1170 = vmin.f32 %v658, 1.0
        %v1171 = vmin.f32 %v659, 1.0
        %v1172 = vmin.f32 %v660, 1.0
        %v1173 = vmin.f32 %v661, 1.0
        %v1174 = vmin.f32 %v662, 1.0
        %v1175 = vmin.f32 %v663, 1.0
        %v1176 = vmin.f32 %v664, 1.0
        %v1177 = vmin.f32 %v665, 1.0
        %v1178 = vmin.f32 %v666, 1.0
        %v1179 = vmin.f32 %v667, 1.0
        %v1180 = vmin.f32 %v668, 1.0
        %v1181 = vmin.f32 %v669, 1.0
        %v1182 = vmin.f32 %v670, 1.0
        %v1183 = vmin.f32 %v671, 1.0
        %v1184 = vmin.f32 %v672, 1.0
        %v1185 = vmin.f32 %v673, 1.0
        %v1186 = vmin.f32 %v674, 1.0
        %v1187 = vmin.f32 %v675, 1.0
        %v1188 = vmin.f32 %v676, 1.0
        %v1189 = vmin.f32 %v677, 1.0
        %v1190 = vmin.f32 %v678, 1.0
        %v1191 = vmin.f32 %v679, 1.0
        %v1192 = vmin.f32 %v680, 1.0
        %v1193 = vmin.f32 %v681, 1.0
        %v1194 = vmin.f32 %v682, 1.0
        %v1195 = vmin.f32 %v683, 1.0
        %v1196 = vmin.f32 %v684, 1.0
        %v1197 = vmin.f32 %v685, 1.0
        %v1198 = vmin.f32 %v686, 1.0
        %v1199 = vmin.f32 %v687, 1.0
        %v1200 = vmin.f32 %v688, 1.0
        %v1201 = vmin.f32 %v689, 1.0
        %v1202 = vmin.f32 %v690, 1.0
        %v1203 = vmin.f32 %v691, 1.0
        %v1204 = vmin.f32 %v692, 1.0
        %v1205 = vmin.f32 %v693, 1.0
        %v1206 = vmin.f32 %v694, 1.0
        %v1207 = vmin.f32 %v695, 1.0
        %v1208 = vmin.f32 %v696, 1.0
        %v1209 = vmin.f32 %v697, 1.0
        %v1210 = vmin.f32 %v698, 1.0
        %v1211 = vmin.f32 %v699, 1.0
        %v1212 = vmin.f32 %v700, 1.0
        %v1213 = vmin.f32 %v701, 1.0
        %v1214 = vmin.f32 %v702, 1.0
        %v1215 = vmin.f32 %v703, 1.0
        %v1216 = vmin.f32 %v704, 1.0
        %v1217 = vmin.f32 %v705, 1.0
        %v1218 = vmin.f32 %v706, 1.0
        %v1219 = vmin.f32 %v707, 1.0
        %v1220 = vmin.f32 %v708, 1.0
        %v1221 = vmin.f32 %v709, 1.0
        %v1222 = vmin.f32 %v710, 1.0
        %v1223 = vmin.f32 %v711, 1.0
        %v1224 = vmin.f32 %v712, 1.0
        %v1225 = vmin.f32 %v713, 1.0
        %v1226 = vmin.f32 %v714, 1.0
        %v1227 = vmin.f32 %v715, 1.0
        %v1228 = vmin.f32 %v716, 1.0
        %v1229 = vmin.f32 %v717, 1.0
        %v1230 = vmin.f32 %v718, 1.0
        %v1231 = vmin.f32 %v719, 1.0
        %v1232 = vmin.f32 %v720, 1.0
        %v1233 = vmin.f32 %v721, 1.0
        %v1234 = vmin.f32 %v722, 1.0
        %v1235 = vmin.f32 %v723, 1.0
        %v1236 = vmin.f32 %v724, 1.0
        %v1237 = vmin.f32 %v725, 1.0
        %v1238 = vmin.f32 %v726, 1.0
        %v1239 = vmin.f32 %v727, 1.0
        %v1240 = vmin.f32 %v728, 1.0
        %v1241 = vmin.f32 %v729, 1.0
        %v1242 = vmin.f32 %v730, 1.0
        %v1243 = vmin.f32 %v731, 1.0
        %v1244 = vmin.f32 %v732, 1.0
        %v1245 = vmin.f32 %v733, 1.0
        %v1246 = vmin.f32 %v734, 1.0
        %v1247 = vmin.f32 %v735, 1.0
        %v1248 = vmin.f32 %v736, 1.0
        %v1249 = vmin.f32 %v737, 1.0
        %v1250 = vmin.f32 %v738, 1.0
        %v1251 = vmin.f32 %v739, 1.0
        %v1252 = vmin.f32 %v740, 1.0
        %v1253 = vmin.f32 %v741, 1.0
        %v1254 = vmin.f32 %v742, 1.0
        %v1255 = vmin.f32 %v743, 1.0
        %v1256 = vmin.f32 %v744, 1.0
        %v1257 = vmin.f32 %v745, 1.0
        %v1258 = vmin.f32 %v746, 1.0
        %v1259 = vmin.f32 %v747, 1.0
        %v1260 = vmin.f32 %v748, 1.0
        %v1261 = vmin.f32 %v749, 1.0
        %v1262 = vmin.f32 %v750, 1.0
        %v1263 = vmin.f32 %v751, 1.0
        %v1264 = vmin.f32 %v752, 1.0
        %v1265 = vmin.f32 %v753, 1.0
        %v1266 = vmin.f32 %v754, 1.0
        %v1267 = vmin.f32 %v755, 1.0
        %v1268 = vmin.f32 %v756, 1.0
        %v1269 = vmin.f32 %v757, 1.0
        %v1270 = vmin.f32 %v758, 1.0
        %v1271 = vmin.f32 %v759, 1.0
        %v1272 = vmin.f32 %v760, 1.0
        %v1273 = vmin.f32 %v761, 1.0
        %v1274 = vmin.f32 %v762, 1.0
        %v1275 = vmin.f32 %v763, 1.0
        %v1276 = vmin.f32 %v764, 1.0
        %v1277 = vmin.f32 %v765, 1.0
        %v1278 = vmin.f32 %v766, 1.0
        %v1279 = vmin.f32 %v767, 1.0
        %v1280 = vmin.f32 %v768, 1.0
        %v1281 = vmin.f32 %v769, 1.0
        %v1282 = vmin.f32 %v770, 1.0
        %v1283 = vmin.f32 %v771, 1.0
        %v1284 = vmin.f32 %v772, 1.0
        %v1285 = vmin.f32 %v773, 1.0
        %v1286 = vmin.f32 %v774, 1.0
        %v1287 = vmin.f32 %v775, 1.0
        %v1288 = vmin.f32 %v776, 1.0
        %v1289 = vmin.f32 %v777, 1.0
        %v1290 = vmin.f32 %v778, 1.0
        %v1291 = vmin.f32 %v779, 1.0
        %v1292 = vmin.f32 %v780, 1.0
        %v1293 = vmin.f32 %v781, 1.0
        %v1294 = vmin.f32 %v782, 1.0
        %v1295 = vmin.f32 %v783, 1.0
        %v1296 = vmin.f32 %v784, 1.0
        %v1297 = vmin.f32 %v785, 1.0
        %v1298 = vmin.f32 %v786, 1.0
        %v1299 = vmin.f32 %v787, 1.0
        %v1300 = vmin.f32 %v788, 1.0
        %v1301 = vmin.f32 %v789, 1.0
        %v1302 = vmin.f32 %v790, 1.0
        %v1303 = vmin.f32 %v791, 1.0
        %v1304 = vmin.f32 %v792, 1.0
        %v1305 = vmin.f32 %v793, 1.0
        %v1306 = vmin.f32 %v794, 1.0
        %v1307 = vmin.f32 %v795, 1.0
        %v1308 = vmin.f32 %v796, 1.0
        %v1309 = vmin.f32 %v797, 1.0
        %v1310 = vmin.f32 %v798, 1.0
        %v1311 = vmin.f32 %v799, 1.0
        %v1312 = vmin.f32 %v800, 1.0
        %v1313 = vmin.f32 %v801, 1.0
        %v1314 = vmin.f32 %v802, 1.0
        %v1315 = vmin.f32 %v803, 1.0
        %v1316 = vmin.f32 %v804, 1.0
        %v1317 = vmin.f32 %v805, 1.0
        %v1318 = vmin.f32 %v806, 1.0
        %v1319 = vmin.f32 %v807, 1.0
        %v1320 = vmin.f32 %v808, 1.0
        %v1321 = vmin.f32 %v809, 1.0
        %v1322 = vmin.f32 %v810, 1.0
        %v1323 = vmin.f32 %v811, 1.0
        %v1324 = vmin.f32 %v812, 1.0
        %v1325 = vmin.f32 %v813, 1.0
        %v1326 = vmin.f32 %v814, 1.0
        %v1327 = vmin.f32 %v815, 1.0
        %v1328 = vmin.f32 %v816, 1.0
        %v1329 = vmin.f32 %v817, 1.0
        %v1330 = vmin.f32 %v818, 1.0
        %v1331 = vmin.f32 %v819, 1.0
        %v1332 = vmin.f32 %v820, 1.0
        %v1333 = vmin.f32 %v821, 1.0
        %v1334 = vmin.f32 %v822, 1.0
        %v1335 = vmin.f32 %v823, 1.0
        %v1336 = vmin.f32 %v824, 1.0
        %v1337 = vmin.f32 %v825, 1.0
        %v1338 = vmin.f32 %v826, 1.0
        %v1339 = vmin.f32 %v827, 1.0
        %v1340 = vmin.f32 %v828, 1.0
        %v1341 = vmin.f32 %v829, 1.0
        %v1342 = vmin.f32 %v830, 1.0
        %v1343 = vmin.f32 %v831, 1.0
        %v1344 = vmin.f32 %v832, 1.0
        %v1345 = vmin.f32 %v833, 1.0
        %v1346 = vmin.f32 %v834, 1.0
        %v1347 = vmin.f32 %v835, 1.0
        %v1348 = vmin.f32 %v836, 1.0
        %v1349 = vmin.f32 %v837, 1.0
        %v1350 = vmin.f32 %v838, 1.0
        %v1351 = vmin.f32 %v839, 1.0
        %v1352 = vmin.f32 %v840, 1.0
        %v1353 = vmin.f32 %v841, 1.0
        %v1354 = vmin.f32 %v842, 1.0
        %v1355 = vmin.f32 %v843, 1.0
        %v1356 = vmin.f32 %v844, 1.0
        %v1357 = vmin.f32 %v845, 1.0
        %v1358 = vmin.f32 %v846, 1.0
        %v1359 = vmin.f32 %v847, 1.0
        %v1360 = vmin.f32 %v848, 1.0
        %v1361 = vmin.f32 %v849, 1.0
        %v1362 = vmin.f32 %v850, 1.0
        %v1363 = vmin.f32 %v851, 1.0
        %v1364 = vmin.f32 %v852, 1.0
        %v1365 = vmin.f32 %v853, 1.0
        %v1366 = vmin.f32 %v854, 1.0
        %v1367 = vmin.f32 %v855, 1.0
        %v1368 = vmin.f32 %v856, 1.0
        %v1369 = vmin.f32 %v857, 1.0
        %v1370 = vmin.f32 %v858, 1.0
        %v1371 = vmin.f32 %v859, 1.0
        %v1372 = vmin.f32 %v860, 1.0
        %v1373 = vmin.f32 %v861, 1.0
        %v1374 = vmin.f32 %v862, 1.0
        %v1375 = vmin.f32 %v863, 1.0
        %v1376 = vmin.f32 %v864, 1.0
        %v1377 = vmin.f32 %v865, 1.0
        %v1378 = vmin.f32 %v866, 1.0
        %v1379 = vmin.f32 %v867, 1.0
        %v1380 = vmin.f32 %v868, 1.0
        %v1381 = vmin.f32 %v869, 1.0
        %v1382 = vmin.f32 %v870, 1.0
        %v1383 = vmin.f32 %v871, 1.0
        %v1384 = vmin.f32 %v872, 1.0
        %v1385 = vmin.f32 %v873, 1.0
        %v1386 = vmin.f32 %v874, 1.0
        %v1387 = vmin.f32 %v875, 1.0
        %v1388 = vmin.f32 %v876, 1.0
        %v1389 = vmin.f32 %v877, 1.0
        %v1390 = vmin.f32 %v878, 1.0
        %v1391 = vmin.f32 %v879, 1.0
        %v1392 = vmin.f32 %v880, 1.0
        %v1393 = vmin.f32 %v881, 1.0
        %v1394 = vmin.f32 %v882, 1.0
        %v1395 = vmin.f32 %v883, 1.0
        %v1396 = vmin.f32 %v884, 1.0
        %v1397 = vmin.f32 %v885, 1.0
        %v1398 = vmin.f32 %v886, 1.0
        %v1399 = vmin.f32 %v887, 1.0
        %v1400 = vmin.f32 %v888, 1.0
        %v1401 = vmin.f32 %v889, 1.0
        %v1402 = vmin.f32 %v890, 1.0
        %v1403 = vmin.f32 %v891, 1.0
        %v1404 = vmin.f32 %v892, 1.0
        %v1405 = vmin.f32 %v893, 1.0
        %v1406 = vmin.f32 %v894, 1.0
        %v1407 = vmin.f32 %v895, 1.0
        %v1408 = vmin.f32 %v896, 1.0
        %v1409 = vmin.f32 %v897, 1.0
        %v1410 = vmin.f32 %v898, 1.0
        %v1411 = vmin.f32 %v899, 1.0
        %v1412 = vmin.f32 %v900, 1.0
        %v1413 = vmin.f32 %v901, 1.0
        %v1414 = vmin.f32 %v902, 1.0
        %v1415 = vmin.f32 %v903, 1.0
        %v1416 = vmin.f32 %v904, 1.0
        %v1417 = vmin.f32 %v905, 1.0
        %v1418 = vmin.f32 %v906, 1.0
        %v1419 = vmin.f32 %v907, 1.0
        %v1420 = vmin.f32 %v908, 1.0
        %v1421 = vmin.f32 %v909, 1.0
        %v1422 = vmin.f32 %v910, 1.0
        %v1423 = vmin.f32 %v911, 1.0
        %v1424 = vmin.f32 %v912, 1.0
        %v1425 = vmin.f32 %v913, 1.0
        %v1426 = vmin.f32 %v914, 1.0
        %v1427 = vmin.f32 %v915, 1.0
        %v1428 = vmin.f32 %v916, 1.0
        %v1429 = vmin.f32 %v917, 1.0
        %v1430 = vmin.f32 %v918, 1.0
        %v1431 = vmin.f32 %v919, 1.0
        %v1432 = vmin.f32 %v920, 1.0
        %v1433 = vmin.f32 %v921, 1.0
        %v1434 = vmin.f32 %v922, 1.0
        %v1435 = vmin.f32 %v923, 1.0
        %v1436 = vmin.f32 %v924, 1.0
        %v1437 = vmin.f32 %v925, 1.0
        %v1438 = vmin.f32 %v926, 1.0
        %v1439 = vmin.f32 %v927, 1.0
        %v1440 = vmin.f32 %v928, 1.0
        %v1441 = vmin.f32 %v929, 1.0
        %v1442 = vmin.f32 %v930, 1.0
        %v1443 = vmin.f32 %v931, 1.0
        %v1444 = vmin.f32 %v932, 1.0
        %v1445 = vmin.f32 %v933, 1.0
        %v1446 = vmin.f32 %v934, 1.0
        %v1447 = vmin.f32 %v935, 1.0
        %v1448 = vmin.f32 %v936, 1.0
        %v1449 = vmin.f32 %v937, 1.0
        %v1450 = vmin.f32 %v938, 1.0
        %v1451 = vmin.f32 %v939, 1.0
        %v1452 = vmin.f32 %v940, 1.0
        %v1453 = vmin.f32 %v941, 1.0
        %v1454 = vmin.f32 %v942, 1.0
        %v1455 = vmin.f32 %v943, 1.0
        %v1456 = vmin.f32 %v944, 1.0
        %v1457 = vmin.f32 %v945, 1.0
        %v1458 = vmin.f32 %v946, 1.0
        %v1459 = vmin.f32 %v947, 1.0
        %v1460 = vmin.f32 %v948, 1.0
        %v1461 = vmin.f32 %v949, 1.0
        %v1462 = vmin.f32 %v950, 1.0
        %v1463 = vmin.f32 %v951, 1.0
        %v1464 = vmin.f32 %v952, 1.0
        %v1465 = vmin.f32 %v953, 1.0
        %v1466 = vmin.f32 %v954, 1.0
        %v1467 = vmin.f32 %v955, 1.0
        %v1468 = vmin.f32 %v956, 1.0
        %v1469 = vmin.f32 %v957, 1.0
        %v1470 = vmin.f32 %v958, 1.0
        %v1471 = vmin.f32 %v959, 1.0
        %v1472 = vmin.f32 %v960, 1.0
        %v1473 = vmin.f32 %v961, 1.0
        %v1474 = vmin.f32 %v962, 1.0
        %v1475 = vmin.f32 %v963, 1.0
        %v1476 = vmin.f32 %v964, 1.0
        %v1477 = vmin.f32 %v965, 1.0
        %v1478 = vmin.f32 %v966, 1.0
        %v1479 = vmin.f32 %v967, 1.0
        %v1480 = vmin.f32 %v968, 1.0
        %v1481 = vmin.f32 %v969, 1.0
        %v1482 = vmin.f32 %v970, 1.0
        %v1483 = vmin.f32 %v971, 1.0
        %v1484 = vmin.f32 %v972, 1.0
        %v1485 = vmin.f32 %v973, 1.0
        %v1486 = vmin.f32 %v974, 1.0
        %v1487 = vmin.f32 %v975, 1.0
        %v1488 = vmin.f32 %v976, 1.0
        %v1489 = vmin.f32 %v977, 1.0
        %v1490 = vmin.f32 %v978, 1.0
        %v1491 = vmin.f32 %v979, 1.0
        %v1492 = vmin.f32 %v980, 1.0
        %v1493 = vmin.f32 %v981, 1.0
        %v1494 = vmin.f32 %v982, 1.0
        %v1495 = vmin.f32 %v983, 1.0
        %v1496 = vmin.f32 %v984, 1.0
        %v1497 = vmin.f32 %v985, 1.0
        %v1498 = vmin.f32 %v986, 1.0
        %v1499 = vmin.f32 %v987, 1.0
        %v1500 = vmin.f32 %v988, 1.0
        %v1501 = vmin.f32 %v989, 1.0
        %v1502 = vmin.f32 %v990, 1.0
        %v1503 = vmin.f32 %v991, 1.0
        %v1504 = vmin.f32 %v992, 1.0
        %v1505 = vmin.f32 %v993, 1.0
        %v1506 = vmin.f32 %v994, 1.0
        %v1507 = vmin.f32 %v995, 1.0
        %v1508 = vmin.f32 %v996, 1.0
        %v1509 = vmin.f32 %v997, 1.0
        %v1510 = vmin.f32 %v998, 1.0
        %v1511 = vmin.f32 %v999, 1.0
        %v1512 = vmin.f32 %v1000, 1.0
        %v1513 = vmin.f32 %v1001, 1.0
        %v1514 = vmin.f32 %v1002, 1.0
        %v1515 = vmin.f32 %v1003, 1.0
        %v1516 = vmin.f32 %v1004, 1.0
        %v1517 = vmin.f32 %v1005, 1.0
        %v1518 = vmin.f32 %v1006, 1.0
        %v1519 = vmin.f32 %v1007, 1.0
        %v1520 = vmin.f32 %v1008, 1.0
        %v1521 = vmin.f32 %v1009, 1.0
        %v1522 = vmin.f32 %v1010, 1.0
        %v1523 = vmin.f32 %v1011, 1.0
        %v1524 = vmin.f32 %v1012, 1.0
        %v1525 = vmin.f32 %v1013, 1.0
        %v1526 = vmin.f32 %v1014, 1.0
        %v1527 = vmin.f32 %v1015, 1.0
        %v1528 = vmin.f32 %v1016, 1.0
        %v1529 = vmin.f32 %v1017, 1.0
        %v1530 = vmin.f32 %v1018, 1.0
        %v1531 = vmin.f32 %v1019, 1.0
        %v1532 = vmin.f32 %v1020, 1.0
        %v1533 = vmin.f32 %v1021, 1.0
        %v1534 = vmin.f32 %v1022, 1.0
        %v1535 = vmin.f32 %v1023, 1.0
        %v1536 = vmin.f32 %v1024, 1.0
        %v1537 = vmin.f32 %v1025, 1.0
        %v1538 = vmin.f32 %v1026, 1.0
        %v1539 = vmin.f32 %v1027, 1.0
        %v1540 = vmin.f32 %v1028, 1.0
        %v1541 = vmin.f32 %v1029, 1.0
        %v1542 = vmin.f32 %v1030, 1.0
        %v1543 = vmin.f32 %v1031, 1.0
        %v1544 = vmin.f32 %v1032, 1.0
        %v1545 = vmin.f32 %v1033, 1.0
        %v1546 = vmin.f32 %v1034, 1.0
        %v1547 = vmin.f32 %v1035, 1.0
        %v1548 = vmin.f32 %v1036, 1.0
        %v1549 = vmin.f32 %v1037, 1.0
        %v1550 = vmin.f32 %v1038, 1.0
        %v1551 = vmin.f32 %v1039, 1.0
        %v1552 = vmin.f32 %v1040, 1.0
        %v1553 = vmin.f32 %v1041, 1.0
        %v1554 = vmin.f32 %v1042, 1.0
        %v1555 = vmin.f32 %v1043, 1.0
        %v1556 = vmin.f32 %v1044, 1.0
        %v1557 = vmin.f32 %v1045, 1.0
        %v1558 = vmin.f32 %v1046, 1.0
        %v1559 = vmin.f32 %v1047, 1.0
        %v1560 = vmin.f32 %v1048, 1.0
        %v1561 = vmin.f32 %v1049, 1.0
        %v1562 = vmin.f32 %v1050, 1.0
        %v1563 = vmin.f32 %v1051, 1.0
        %v1564 = vmin.f32 %v1052, 1.0
        %v1565 = vmin.f32 %v1053, 1.0
        %v1566 = vmin.f32 %v1054, 1.0
        %v1567 = vmin.f32 %v1055, 1.0
        %v1568 = vmin.f32 %v1056, 1.0
        %v1569 = vmin.f32 %v1057, 1.0
        %v1570 = vmin.f32 %v1058, 1.0
        %v1571 = vmin.f32 %v1059, 1.0
        %v1572 = vmin.f32 %v1060, 1.0
        %v1573 = vmin.f32 %v1061, 1.0
        %v1574 = vmin.f32 %v1062, 1.0
        %v1575 = vmin.f32 %v1063, 1.0
        %v1576 = vmin.f32 %v1064, 1.0
        %v1577 = vmin.f32 %v1065, 1.0
        %v1578 = vmin.f32 %v1066, 1.0
        %v1579 = vmin.f32 %v1067, 1.0
        %v1580 = vmin.f32 %v1068, 1.0
        %v1581 = vmin.f32 %v1069, 1.0
        %v1582 = vmin.f32 %v1070, 1.0
        %v1583 = vmin.f32 %v1071, 1.0
        %v1584 = vmin.f32 %v1072, 1.0
        %v1585 = vmin.f32 %v1073, 1.0
        %v1586 = vmin.f32 %v1074, 1.0
        %v1587 = vmin.f32 %v1075, 1.0
        %v1588 = vmin.f32 %v1076, 1.0
        %v1589 = vmin.f32 %v1077, 1.0
        %v1590 = vmin.f32 %v1078, 1.0
        %v1591 = vmin.f32 %v1079, 1.0
        %v1592 = vmin.f32 %v1080, 1.0
        %v1593 = vmin.f32 %v1081, 1.0
        %v1594 = vmin.f32 %v1082, 1.0
        %v1595 = vmin.f32 %v1083, 1.0
        %v1596 = vmin.f32 %v1084, 1.0
        %v1597 = vmin.f32 %v1085, 1.0
        %v1598 = vmin.f32 %v1086, 1.0
        %v1599 = vmin.f32 %v1087, 1.0
        %v1600 = vmin.f32 %v1088, 1.0
        %v1601 = vmin.f32 %v1089, 1.0
        %v1602 = vmin.f32 %v1090, 1.0
        %v1603 = vmin.f32 %v1091, 1.0
        %v1604 = vmin.f32 %v1092, 1.0
        %v1605 = vmin.f32 %v1093, 1.0
        %v1606 = vmin.f32 %v1094, 1.0
        %v1607 = vmin.f32 %v1095, 1.0
        %v1608 = vmin.f32 %v1096, 1.0
        %v1609 = vmin.f32 %v1097, 1.0
        %v1610 = vmin.f32 %v1098, 1.0
        %v1611 = vmin.f32 %v1099, 1.0
        %v1612 = vmin.f32 %v1100, 1.0
        %v1613 = vmin.f32 %v1101, 1.0
        %v1614 = vmin.f32 %v1102, 1.0
        %v1615 = vmin.f32 %v1103, 1.0
        %v1616 = vmin.f32 %v1104, 1.0
        %v1617 = vmin.f32 %v1105, 1.0
        %v1618 = vmin.f32 %v1106, 1.0
        %v1619 = vmin.f32 %v1107, 1.0
        %v1620 = vmin.f32 %v1108, 1.0
        %v1621 = vmin.f32 %v1109, 1.0
        %v1622 = vmin.f32 %v1110, 1.0
        %v1623 = vmin.f32 %v1111, 1.0
        %v1624 = vmin.f32 %v1112, 1.0
        %v1625 = vmin.f32 %v1113, 1.0
        %v1626 = vmin.f32 %v1114, 1.0
        %v1627 = vmin.f32 %v1115, 1.0
        %v1628 = vmin.f32 %v1116, 1.0
        %v1629 = vmin.f32 %v1117, 1.0
        %v1630 = vmin.f32 %v1118, 1.0
        %v1631 = vmin.f32 %v1119, 1.0
        %v1632 = vmin.f32 %v1120, 1.0
        %v1633 = vmin.f32 %v1121, 1.0
        %v1634 = vmin.f32 %v1122, 1.0
        %v1635 = vmin.f32 %v1123, 1.0
        %v1636 = vmin.f32 %v1124, 1.0
        %v1637 = vmin.f32 %v1125, 1.0
        %v1638 = vmin.f32 %v1126, 1.0
        %v1639 = vmin.f32 %v1127, 1.0
        %v1640 = vmin.f32 %v1128, 1.0
        %v1641 = vmin.f32 %v1129, 1.0
        %v1642 = vmin.f32 %v1130, 1.0
        %v1643 = vmin.f32 %v1131, 1.0
        %v1644 = vmin.f32 %v1132, 1.0
        %v1645 = vmin.f32 %v1133, 1.0
        %v1646 = vmin.f32 %v1134, 1.0
        %v1647 = vmin.f32 %v1135, 1.0
        %v1648 = vmin.f32 %v1136, 1.0
        %v1649 = vmin.f32 %v1137, 1.0
        %v1650 = vmin.f32 %v1138, 1.0
        %v1651 = vmin.f32 %v1139, 1.0
        %v1652 = vmin.f32 %v1140, 1.0
        %v1653 = vmin.f32 %v1141, 1.0
        %v1654 = vmin.f32 %v1142, 1.0
        %v1655 = vmin.f32 %v1143, 1.0
        %v1656 = vmin.f32 %v1144, 1.0
        %v1657 = vmin.f32 %v1145, 1.0
        %v1658 = vmin.f32 %v1146, 1.0
        %v1659 = vmin.f32 %v1147, 1.0
        %v1660 = vmin.f32 %v1148, 1.0
        %v1661 = vmin.f32 %v1149, 1.0
        %v1662 = vmin.f32 %v1150, 1.0
        %v1663 = vmin.f32 %v1151, 1.0
        %v1664 = vmin.f32 %v1152, 1.0
        %v1665 = vmin.f32 %v1153, 1.0
        %v1666 = vmin.f32 %v1154, 1.0
        %v1667 = vmin.f32 %v1155, 1.0
        %v1668 = vmin.f32 %v1156, 1.0
        %v1669 = vmin.f32 %v1157, 1.0
        %v1670 = vmin.f32 %v1158, 1.0
        %v1671 = vmin.f32 %v1159, 1.0
        %v1672 = vmin.f32 %v1160, 1.0
        %v1673 = vmin.f32 %v1161, 1.0
        %v1674 = vmin.f32 %v1162, 1.0
        %v1675 = vmin.f32 %v1163, 1.0
        %1676 = vst [vmem:[%s137] sm:$0xff] %v1164
        %1677 = vst [vmem:[%s137 + $0x8] sm:$0xff] %v1165
        %1678 = vst [vmem:[%s137 + $0x10] sm:$0xff] %v1166
        %1679 = vst [vmem:[%s137 + $0x18] sm:$0xff] %v1167
        %1680 = vst [vmem:[%s137 + $0x20] sm:$0xff] %v1168
        %1681 = vst [vmem:[%s137 + $0x28] sm:$0xff] %v1169
        %1682 = vst [vmem:[%s137 + $0x30] sm:$0xff] %v1170
        %1683 = vst [vmem:[%s137 + $0x38] sm:$0xff] %v1171
        %1684 = vst [vmem:[%s137 + $0x40] sm:$0xff] %v1172
        %1685 = vst [vmem:[%s137 + $0x48] sm:$0xff] %v1173
        %1686 = vst [vmem:[%s137 + $0x50] sm:$0xff] %v1174
        %1687 = vst [vmem:[%s137 + $0x58] sm:$0xff] %v1175
        %1688 = vst [vmem:[%s137 + $0x60] sm:$0xff] %v1176
        %1689 = vst [vmem:[%s137 + $0x68] sm:$0xff] %v1177
        %1690 = vst [vmem:[%s137 + $0x70] sm:$0xff] %v1178
        %1691 = vst [vmem:[%s137 + $0x78] sm:$0xff] %v1179
        %1692 = vst [vmem:[%s137 + $0x80] sm:$0xff] %v1180
        %1693 = vst [vmem:[%s137 + $0x88] sm:$0xff] %v1181
        %1694 = vst [vmem:[%s137 + $0x90] sm:$0xff] %v1182
        %1695 = vst [vmem:[%s137 + $0x98] sm:$0xff] %v1183
        %1696 = vst [vmem:[%s137 + $0xa0] sm:$0xff] %v1184
        %1697 = vst [vmem:[%s137 + $0xa8] sm:$0xff] %v1185
        %1698 = vst [vmem:[%s137 + $0xb0] sm:$0xff] %v1186
        %1699 = vst [vmem:[%s137 + $0xb8] sm:$0xff] %v1187
        %1700 = vst [vmem:[%s137 + $0xc0] sm:$0xff] %v1188
        %1701 = vst [vmem:[%s137 + $0xc8] sm:$0xff] %v1189
        %1702 = vst [vmem:[%s137 + $0xd0] sm:$0xff] %v1190
        %1703 = vst [vmem:[%s137 + $0xd8] sm:$0xff] %v1191
        %1704 = vst [vmem:[%s137 + $0xe0] sm:$0xff] %v1192
        %1705 = vst [vmem:[%s137 + $0xe8] sm:$0xff] %v1193
        %1706 = vst [vmem:[%s137 + $0xf0] sm:$0xff] %v1194
        %1707 = vst [vmem:[%s137 + $0xf8] sm:$0xff] %v1195
        %1708 = vst [vmem:[%s137 + $0x100] sm:$0xff] %v1196
        %1709 = vst [vmem:[%s137 + $0x108] sm:$0xff] %v1197
        %1710 = vst [vmem:[%s137 + $0x110] sm:$0xff] %v1198
        %1711 = vst [vmem:[%s137 + $0x118] sm:$0xff] %v1199
        %1712 = vst [vmem:[%s137 + $0x120] sm:$0xff] %v1200
        %1713 = vst [vmem:[%s137 + $0x128] sm:$0xff] %v1201
        %1714 = vst [vmem:[%s137 + $0x130] sm:$0xff] %v1202
        %1715 = vst [vmem:[%s137 + $0x138] sm:$0xff] %v1203
        %1716 = vst [vmem:[%s137 + $0x140] sm:$0xff] %v1204
        %1717 = vst [vmem:[%s137 + $0x148] sm:$0xff] %v1205
        %1718 = vst [vmem:[%s137 + $0x150] sm:$0xff] %v1206
        %1719 = vst [vmem:[%s137 + $0x158] sm:$0xff] %v1207
        %1720 = vst [vmem:[%s137 + $0x160] sm:$0xff] %v1208
        %1721 = vst [vmem:[%s137 + $0x168] sm:$0xff] %v1209
        %1722 = vst [vmem:[%s137 + $0x170] sm:$0xff] %v1210
        %1723 = vst [vmem:[%s137 + $0x178] sm:$0xff] %v1211
        %1724 = vst [vmem:[%s137 + $0x180] sm:$0xff] %v1212
        %1725 = vst [vmem:[%s137 + $0x188] sm:$0xff] %v1213
        %1726 = vst [vmem:[%s137 + $0x190] sm:$0xff] %v1214
        %1727 = vst [vmem:[%s137 + $0x198] sm:$0xff] %v1215
        %1728 = vst [vmem:[%s137 + $0x1a0] sm:$0xff] %v1216
        %1729 = vst [vmem:[%s137 + $0x1a8] sm:$0xff] %v1217
        %1730 = vst [vmem:[%s137 + $0x1b0] sm:$0xff] %v1218
        %1731 = vst [vmem:[%s137 + $0x1b8] sm:$0xff] %v1219
        %1732 = vst [vmem:[%s137 + $0x1c0] sm:$0xff] %v1220
        %1733 = vst [vmem:[%s137 + $0x1c8] sm:$0xff] %v1221
        %1734 = vst [vmem:[%s137 + $0x1d0] sm:$0xff] %v1222
        %1735 = vst [vmem:[%s137 + $0x1d8] sm:$0xff] %v1223
        %1736 = vst [vmem:[%s137 + $0x1e0] sm:$0xff] %v1224
        %1737 = vst [vmem:[%s137 + $0x1e8] sm:$0xff] %v1225
        %1738 = vst [vmem:[%s137 + $0x1f0] sm:$0xff] %v1226
        %1739 = vst [vmem:[%s137 + $0x1f8] sm:$0xff] %v1227
        %1740 = vst [vmem:[%s137 + $0x200] sm:$0xff] %v1228
        %1741 = vst [vmem:[%s137 + $0x208] sm:$0xff] %v1229
        %1742 = vst [vmem:[%s137 + $0x210] sm:$0xff] %v1230
        %1743 = vst [vmem:[%s137 + $0x218] sm:$0xff] %v1231
        %1744 = vst [vmem:[%s137 + $0x220] sm:$0xff] %v1232
        %1745 = vst [vmem:[%s137 + $0x228] sm:$0xff] %v1233
        %1746 = vst [vmem:[%s137 + $0x230] sm:$0xff] %v1234
        %1747 = vst [vmem:[%s137 + $0x238] sm:$0xff] %v1235
        %1748 = vst [vmem:[%s137 + $0x240] sm:$0xff] %v1236
        %1749 = vst [vmem:[%s137 + $0x248] sm:$0xff] %v1237
        %1750 = vst [vmem:[%s137 + $0x250] sm:$0xff] %v1238
        %1751 = vst [vmem:[%s137 + $0x258] sm:$0xff] %v1239
        %1752 = vst [vmem:[%s137 + $0x260] sm:$0xff] %v1240
        %1753 = vst [vmem:[%s137 + $0x268] sm:$0xff] %v1241
        %1754 = vst [vmem:[%s137 + $0x270] sm:$0xff] %v1242
        %1755 = vst [vmem:[%s137 + $0x278] sm:$0xff] %v1243
        %1756 = vst [vmem:[%s137 + $0x280] sm:$0xff] %v1244
        %1757 = vst [vmem:[%s137 + $0x288] sm:$0xff] %v1245
        %1758 = vst [vmem:[%s137 + $0x290] sm:$0xff] %v1246
        %1759 = vst [vmem:[%s137 + $0x298] sm:$0xff] %v1247
        %1760 = vst [vmem:[%s137 + $0x2a0] sm:$0xff] %v1248
        %1761 = vst [vmem:[%s137 + $0x2a8] sm:$0xff] %v1249
        %1762 = vst [vmem:[%s137 + $0x2b0] sm:$0xff] %v1250
        %1763 = vst [vmem:[%s137 + $0x2b8] sm:$0xff] %v1251
        %1764 = vst [vmem:[%s137 + $0x2c0] sm:$0xff] %v1252
        %1765 = vst [vmem:[%s137 + $0x2c8] sm:$0xff] %v1253
        %1766 = vst [vmem:[%s137 + $0x2d0] sm:$0xff] %v1254
        %1767 = vst [vmem:[%s137 + $0x2d8] sm:$0xff] %v1255
        %1768 = vst [vmem:[%s137 + $0x2e0] sm:$0xff] %v1256
        %1769 = vst [vmem:[%s137 + $0x2e8] sm:$0xff] %v1257
        %1770 = vst [vmem:[%s137 + $0x2f0] sm:$0xff] %v1258
        %1771 = vst [vmem:[%s137 + $0x2f8] sm:$0xff] %v1259
        %1772 = vst [vmem:[%s137 + $0x300] sm:$0xff] %v1260
        %1773 = vst [vmem:[%s137 + $0x308] sm:$0xff] %v1261
        %1774 = vst [vmem:[%s137 + $0x310] sm:$0xff] %v1262
        %1775 = vst [vmem:[%s137 + $0x318] sm:$0xff] %v1263
        %1776 = vst [vmem:[%s137 + $0x320] sm:$0xff] %v1264
        %1777 = vst [vmem:[%s137 + $0x328] sm:$0xff] %v1265
        %1778 = vst [vmem:[%s137 + $0x330] sm:$0xff] %v1266
        %1779 = vst [vmem:[%s137 + $0x338] sm:$0xff] %v1267
        %1780 = vst [vmem:[%s137 + $0x340] sm:$0xff] %v1268
        %1781 = vst [vmem:[%s137 + $0x348] sm:$0xff] %v1269
        %1782 = vst [vmem:[%s137 + $0x350] sm:$0xff] %v1270
        %1783 = vst [vmem:[%s137 + $0x358] sm:$0xff] %v1271
        %1784 = vst [vmem:[%s137 + $0x360] sm:$0xff] %v1272
        %1785 = vst [vmem:[%s137 + $0x368] sm:$0xff] %v1273
        %1786 = vst [vmem:[%s137 + $0x370] sm:$0xff] %v1274
        %1787 = vst [vmem:[%s137 + $0x378] sm:$0xff] %v1275
        %1788 = vst [vmem:[%s137 + $0x380] sm:$0xff] %v1276
        %1789 = vst [vmem:[%s137 + $0x388] sm:$0xff] %v1277
        %1790 = vst [vmem:[%s137 + $0x390] sm:$0xff] %v1278
        %1791 = vst [vmem:[%s137 + $0x398] sm:$0xff] %v1279
        %1792 = vst [vmem:[%s137 + $0x3a0] sm:$0xff] %v1280
        %1793 = vst [vmem:[%s137 + $0x3a8] sm:$0xff] %v1281
        %1794 = vst [vmem:[%s137 + $0x3b0] sm:$0xff] %v1282
        %1795 = vst [vmem:[%s137 + $0x3b8] sm:$0xff] %v1283
        %1796 = vst [vmem:[%s137 + $0x3c0] sm:$0xff] %v1284
        %1797 = vst [vmem:[%s137 + $0x3c8] sm:$0xff] %v1285
        %1798 = vst [vmem:[%s137 + $0x3d0] sm:$0xff] %v1286
        %1799 = vst [vmem:[%s137 + $0x3d8] sm:$0xff] %v1287
        %1800 = vst [vmem:[%s137 + $0x3e0] sm:$0xff] %v1288
        %1801 = vst [vmem:[%s137 + $0x3e8] sm:$0xff] %v1289
        %1802 = vst [vmem:[%s137 + $0x3f0] sm:$0xff] %v1290
        %1803 = vst [vmem:[%s137 + $0x3f8] sm:$0xff] %v1291
        %1804 = vst [vmem:[%s137 + $0x400] sm:$0xff] %v1292
        %1805 = vst [vmem:[%s137 + $0x408] sm:$0xff] %v1293
        %1806 = vst [vmem:[%s137 + $0x410] sm:$0xff] %v1294
        %1807 = vst [vmem:[%s137 + $0x418] sm:$0xff] %v1295
        %1808 = vst [vmem:[%s137 + $0x420] sm:$0xff] %v1296
        %1809 = vst [vmem:[%s137 + $0x428] sm:$0xff] %v1297
        %1810 = vst [vmem:[%s137 + $0x430] sm:$0xff] %v1298
        %1811 = vst [vmem:[%s137 + $0x438] sm:$0xff] %v1299
        %1812 = vst [vmem:[%s137 + $0x440] sm:$0xff] %v1300
        %1813 = vst [vmem:[%s137 + $0x448] sm:$0xff] %v1301
        %1814 = vst [vmem:[%s137 + $0x450] sm:$0xff] %v1302
        %1815 = vst [vmem:[%s137 + $0x458] sm:$0xff] %v1303
        %1816 = vst [vmem:[%s137 + $0x460] sm:$0xff] %v1304
        %1817 = vst [vmem:[%s137 + $0x468] sm:$0xff] %v1305
        %1818 = vst [vmem:[%s137 + $0x470] sm:$0xff] %v1306
        %1819 = vst [vmem:[%s137 + $0x478] sm:$0xff] %v1307
        %1820 = vst [vmem:[%s137 + $0x480] sm:$0xff] %v1308
        %1821 = vst [vmem:[%s137 + $0x488] sm:$0xff] %v1309
        %1822 = vst [vmem:[%s137 + $0x490] sm:$0xff] %v1310
        %1823 = vst [vmem:[%s137 + $0x498] sm:$0xff] %v1311
        %1824 = vst [vmem:[%s137 + $0x4a0] sm:$0xff] %v1312
        %1825 = vst [vmem:[%s137 + $0x4a8] sm:$0xff] %v1313
        %1826 = vst [vmem:[%s137 + $0x4b0] sm:$0xff] %v1314
        %1827 = vst [vmem:[%s137 + $0x4b8] sm:$0xff] %v1315
        %1828 = vst [vmem:[%s137 + $0x4c0] sm:$0xff] %v1316
        %1829 = vst [vmem:[%s137 + $0x4c8] sm:$0xff] %v1317
        %1830 = vst [vmem:[%s137 + $0x4d0] sm:$0xff] %v1318
        %1831 = vst [vmem:[%s137 + $0x4d8] sm:$0xff] %v1319
        %1832 = vst [vmem:[%s137 + $0x4e0] sm:$0xff] %v1320
        %1833 = vst [vmem:[%s137 + $0x4e8] sm:$0xff] %v1321
        %1834 = vst [vmem:[%s137 + $0x4f0] sm:$0xff] %v1322
        %1835 = vst [vmem:[%s137 + $0x4f8] sm:$0xff] %v1323
        %1836 = vst [vmem:[%s137 + $0x500] sm:$0xff] %v1324
        %1837 = vst [vmem:[%s137 + $0x508] sm:$0xff] %v1325
        %1838 = vst [vmem:[%s137 + $0x510] sm:$0xff] %v1326
        %1839 = vst [vmem:[%s137 + $0x518] sm:$0xff] %v1327
        %1840 = vst [vmem:[%s137 + $0x520] sm:$0xff] %v1328
        %1841 = vst [vmem:[%s137 + $0x528] sm:$0xff] %v1329
        %1842 = vst [vmem:[%s137 + $0x530] sm:$0xff] %v1330
        %1843 = vst [vmem:[%s137 + $0x538] sm:$0xff] %v1331
        %1844 = vst [vmem:[%s137 + $0x540] sm:$0xff] %v1332
        %1845 = vst [vmem:[%s137 + $0x548] sm:$0xff] %v1333
        %1846 = vst [vmem:[%s137 + $0x550] sm:$0xff] %v1334
        %1847 = vst [vmem:[%s137 + $0x558] sm:$0xff] %v1335
        %1848 = vst [vmem:[%s137 + $0x560] sm:$0xff] %v1336
        %1849 = vst [vmem:[%s137 + $0x568] sm:$0xff] %v1337
        %1850 = vst [vmem:[%s137 + $0x570] sm:$0xff] %v1338
        %1851 = vst [vmem:[%s137 + $0x578] sm:$0xff] %v1339
        %1852 = vst [vmem:[%s137 + $0x580] sm:$0xff] %v1340
        %1853 = vst [vmem:[%s137 + $0x588] sm:$0xff] %v1341
        %1854 = vst [vmem:[%s137 + $0x590] sm:$0xff] %v1342
        %1855 = vst [vmem:[%s137 + $0x598] sm:$0xff] %v1343
        %1856 = vst [vmem:[%s137 + $0x5a0] sm:$0xff] %v1344
        %1857 = vst [vmem:[%s137 + $0x5a8] sm:$0xff] %v1345
        %1858 = vst [vmem:[%s137 + $0x5b0] sm:$0xff] %v1346
        %1859 = vst [vmem:[%s137 + $0x5b8] sm:$0xff] %v1347
        %1860 = vst [vmem:[%s137 + $0x5c0] sm:$0xff] %v1348
        %1861 = vst [vmem:[%s137 + $0x5c8] sm:$0xff] %v1349
        %1862 = vst [vmem:[%s137 + $0x5d0] sm:$0xff] %v1350
        %1863 = vst [vmem:[%s137 + $0x5d8] sm:$0xff] %v1351
        %1864 = vst [vmem:[%s137 + $0x5e0] sm:$0xff] %v1352
        %1865 = vst [vmem:[%s137 + $0x5e8] sm:$0xff] %v1353
        %1866 = vst [vmem:[%s137 + $0x5f0] sm:$0xff] %v1354
        %1867 = vst [vmem:[%s137 + $0x5f8] sm:$0xff] %v1355
        %1868 = vst [vmem:[%s137 + $0x600] sm:$0xff] %v1356
        %1869 = vst [vmem:[%s137 + $0x608] sm:$0xff] %v1357
        %1870 = vst [vmem:[%s137 + $0x610] sm:$0xff] %v1358
        %1871 = vst [vmem:[%s137 + $0x618] sm:$0xff] %v1359
        %1872 = vst [vmem:[%s137 + $0x620] sm:$0xff] %v1360
        %1873 = vst [vmem:[%s137 + $0x628] sm:$0xff] %v1361
        %1874 = vst [vmem:[%s137 + $0x630] sm:$0xff] %v1362
        %1875 = vst [vmem:[%s137 + $0x638] sm:$0xff] %v1363
        %1876 = vst [vmem:[%s137 + $0x640] sm:$0xff] %v1364
        %1877 = vst [vmem:[%s137 + $0x648] sm:$0xff] %v1365
        %1878 = vst [vmem:[%s137 + $0x650] sm:$0xff] %v1366
        %1879 = vst [vmem:[%s137 + $0x658] sm:$0xff] %v1367
        %1880 = vst [vmem:[%s137 + $0x660] sm:$0xff] %v1368
        %1881 = vst [vmem:[%s137 + $0x668] sm:$0xff] %v1369
        %1882 = vst [vmem:[%s137 + $0x670] sm:$0xff] %v1370
        %1883 = vst [vmem:[%s137 + $0x678] sm:$0xff] %v1371
        %1884 = vst [vmem:[%s137 + $0x680] sm:$0xff] %v1372
        %1885 = vst [vmem:[%s137 + $0x688] sm:$0xff] %v1373
        %1886 = vst [vmem:[%s137 + $0x690] sm:$0xff] %v1374
        %1887 = vst [vmem:[%s137 + $0x698] sm:$0xff] %v1375
        %1888 = vst [vmem:[%s137 + $0x6a0] sm:$0xff] %v1376
        %1889 = vst [vmem:[%s137 + $0x6a8] sm:$0xff] %v1377
        %1890 = vst [vmem:[%s137 + $0x6b0] sm:$0xff] %v1378
        %1891 = vst [vmem:[%s137 + $0x6b8] sm:$0xff] %v1379
        %1892 = vst [vmem:[%s137 + $0x6c0] sm:$0xff] %v1380
        %1893 = vst [vmem:[%s137 + $0x6c8] sm:$0xff] %v1381
        %1894 = vst [vmem:[%s137 + $0x6d0] sm:$0xff] %v1382
        %1895 = vst [vmem:[%s137 + $0x6d8] sm:$0xff] %v1383
        %1896 = vst [vmem:[%s137 + $0x6e0] sm:$0xff] %v1384
        %1897 = vst [vmem:[%s137 + $0x6e8] sm:$0xff] %v1385
        %1898 = vst [vmem:[%s137 + $0x6f0] sm:$0xff] %v1386
        %1899 = vst [vmem:[%s137 + $0x6f8] sm:$0xff] %v1387
        %1900 = vst [vmem:[%s137 + $0x700] sm:$0xff] %v1388
        %1901 = vst [vmem:[%s137 + $0x708] sm:$0xff] %v1389
        %1902 = vst [vmem:[%s137 + $0x710] sm:$0xff] %v1390
        %1903 = vst [vmem:[%s137 + $0x718] sm:$0xff] %v1391
        %1904 = vst [vmem:[%s137 + $0x720] sm:$0xff] %v1392
        %1905 = vst [vmem:[%s137 + $0x728] sm:$0xff] %v1393
        %1906 = vst [vmem:[%s137 + $0x730] sm:$0xff] %v1394
        %1907 = vst [vmem:[%s137 + $0x738] sm:$0xff] %v1395
        %1908 = vst [vmem:[%s137 + $0x740] sm:$0xff] %v1396
        %1909 = vst [vmem:[%s137 + $0x748] sm:$0xff] %v1397
        %1910 = vst [vmem:[%s137 + $0x750] sm:$0xff] %v1398
        %1911 = vst [vmem:[%s137 + $0x758] sm:$0xff] %v1399
        %1912 = vst [vmem:[%s137 + $0x760] sm:$0xff] %v1400
        %1913 = vst [vmem:[%s137 + $0x768] sm:$0xff] %v1401
        %1914 = vst [vmem:[%s137 + $0x770] sm:$0xff] %v1402
        %1915 = vst [vmem:[%s137 + $0x778] sm:$0xff] %v1403
        %1916 = vst [vmem:[%s137 + $0x780] sm:$0xff] %v1404
        %1917 = vst [vmem:[%s137 + $0x788] sm:$0xff] %v1405
        %1918 = vst [vmem:[%s137 + $0x790] sm:$0xff] %v1406
        %1919 = vst [vmem:[%s137 + $0x798] sm:$0xff] %v1407
        %1920 = vst [vmem:[%s137 + $0x7a0] sm:$0xff] %v1408
        %1921 = vst [vmem:[%s137 + $0x7a8] sm:$0xff] %v1409
        %1922 = vst [vmem:[%s137 + $0x7b0] sm:$0xff] %v1410
        %1923 = vst [vmem:[%s137 + $0x7b8] sm:$0xff] %v1411
        %1924 = vst [vmem:[%s137 + $0x7c0] sm:$0xff] %v1412
        %1925 = vst [vmem:[%s137 + $0x7c8] sm:$0xff] %v1413
        %1926 = vst [vmem:[%s137 + $0x7d0] sm:$0xff] %v1414
        %1927 = vst [vmem:[%s137 + $0x7d8] sm:$0xff] %v1415
        %1928 = vst [vmem:[%s137 + $0x7e0] sm:$0xff] %v1416
        %1929 = vst [vmem:[%s137 + $0x7e8] sm:$0xff] %v1417
        %1930 = vst [vmem:[%s137 + $0x7f0] sm:$0xff] %v1418
        %1931 = vst [vmem:[%s137 + $0x7f8] sm:$0xff] %v1419
        %1932 = vst [vmem:[%s137 + $0x800] sm:$0xff] %v1420
        %1933 = vst [vmem:[%s137 + $0x808] sm:$0xff] %v1421
        %1934 = vst [vmem:[%s137 + $0x810] sm:$0xff] %v1422
        %1935 = vst [vmem:[%s137 + $0x818] sm:$0xff] %v1423
        %1936 = vst [vmem:[%s137 + $0x820] sm:$0xff] %v1424
        %1937 = vst [vmem:[%s137 + $0x828] sm:$0xff] %v1425
        %1938 = vst [vmem:[%s137 + $0x830] sm:$0xff] %v1426
        %1939 = vst [vmem:[%s137 + $0x838] sm:$0xff] %v1427
        %1940 = vst [vmem:[%s137 + $0x840] sm:$0xff] %v1428
        %1941 = vst [vmem:[%s137 + $0x848] sm:$0xff] %v1429
        %1942 = vst [vmem:[%s137 + $0x850] sm:$0xff] %v1430
        %1943 = vst [vmem:[%s137 + $0x858] sm:$0xff] %v1431
        %1944 = vst [vmem:[%s137 + $0x860] sm:$0xff] %v1432
        %1945 = vst [vmem:[%s137 + $0x868] sm:$0xff] %v1433
        %1946 = vst [vmem:[%s137 + $0x870] sm:$0xff] %v1434
        %1947 = vst [vmem:[%s137 + $0x878] sm:$0xff] %v1435
        %1948 = vst [vmem:[%s137 + $0x880] sm:$0xff] %v1436
        %1949 = vst [vmem:[%s137 + $0x888] sm:$0xff] %v1437
        %1950 = vst [vmem:[%s137 + $0x890] sm:$0xff] %v1438
        %1951 = vst [vmem:[%s137 + $0x898] sm:$0xff] %v1439
        %1952 = vst [vmem:[%s137 + $0x8a0] sm:$0xff] %v1440
        %1953 = vst [vmem:[%s137 + $0x8a8] sm:$0xff] %v1441
        %1954 = vst [vmem:[%s137 + $0x8b0] sm:$0xff] %v1442
        %1955 = vst [vmem:[%s137 + $0x8b8] sm:$0xff] %v1443
        %1956 = vst [vmem:[%s137 + $0x8c0] sm:$0xff] %v1444
        %1957 = vst [vmem:[%s137 + $0x8c8] sm:$0xff] %v1445
        %1958 = vst [vmem:[%s137 + $0x8d0] sm:$0xff] %v1446
        %1959 = vst [vmem:[%s137 + $0x8d8] sm:$0xff] %v1447
        %1960 = vst [vmem:[%s137 + $0x8e0] sm:$0xff] %v1448
        %1961 = vst [vmem:[%s137 + $0x8e8] sm:$0xff] %v1449
        %1962 = vst [vmem:[%s137 + $0x8f0] sm:$0xff] %v1450
        %1963 = vst [vmem:[%s137 + $0x8f8] sm:$0xff] %v1451
        %1964 = vst [vmem:[%s137 + $0x900] sm:$0xff] %v1452
        %1965 = vst [vmem:[%s137 + $0x908] sm:$0xff] %v1453
        %1966 = vst [vmem:[%s137 + $0x910] sm:$0xff] %v1454
        %1967 = vst [vmem:[%s137 + $0x918] sm:$0xff] %v1455
        %1968 = vst [vmem:[%s137 + $0x920] sm:$0xff] %v1456
        %1969 = vst [vmem:[%s137 + $0x928] sm:$0xff] %v1457
        %1970 = vst [vmem:[%s137 + $0x930] sm:$0xff] %v1458
        %1971 = vst [vmem:[%s137 + $0x938] sm:$0xff] %v1459
        %1972 = vst [vmem:[%s137 + $0x940] sm:$0xff] %v1460
        %1973 = vst [vmem:[%s137 + $0x948] sm:$0xff] %v1461
        %1974 = vst [vmem:[%s137 + $0x950] sm:$0xff] %v1462
        %1975 = vst [vmem:[%s137 + $0x958] sm:$0xff] %v1463
        %1976 = vst [vmem:[%s137 + $0x960] sm:$0xff] %v1464
        %1977 = vst [vmem:[%s137 + $0x968] sm:$0xff] %v1465
        %1978 = vst [vmem:[%s137 + $0x970] sm:$0xff] %v1466
        %1979 = vst [vmem:[%s137 + $0x978] sm:$0xff] %v1467
        %1980 = vst [vmem:[%s137 + $0x980] sm:$0xff] %v1468
        %1981 = vst [vmem:[%s137 + $0x988] sm:$0xff] %v1469
        %1982 = vst [vmem:[%s137 + $0x990] sm:$0xff] %v1470
        %1983 = vst [vmem:[%s137 + $0x998] sm:$0xff] %v1471
        %1984 = vst [vmem:[%s137 + $0x9a0] sm:$0xff] %v1472
        %1985 = vst [vmem:[%s137 + $0x9a8] sm:$0xff] %v1473
        %1986 = vst [vmem:[%s137 + $0x9b0] sm:$0xff] %v1474
        %1987 = vst [vmem:[%s137 + $0x9b8] sm:$0xff] %v1475
        %1988 = vst [vmem:[%s137 + $0x9c0] sm:$0xff] %v1476
        %1989 = vst [vmem:[%s137 + $0x9c8] sm:$0xff] %v1477
        %1990 = vst [vmem:[%s137 + $0x9d0] sm:$0xff] %v1478
        %1991 = vst [vmem:[%s137 + $0x9d8] sm:$0xff] %v1479
        %1992 = vst [vmem:[%s137 + $0x9e0] sm:$0xff] %v1480
        %1993 = vst [vmem:[%s137 + $0x9e8] sm:$0xff] %v1481
        %1994 = vst [vmem:[%s137 + $0x9f0] sm:$0xff] %v1482
        %1995 = vst [vmem:[%s137 + $0x9f8] sm:$0xff] %v1483
        %1996 = vst [vmem:[%s137 + $0xa00] sm:$0xff] %v1484
        %1997 = vst [vmem:[%s137 + $0xa08] sm:$0xff] %v1485
        %1998 = vst [vmem:[%s137 + $0xa10] sm:$0xff] %v1486
        %1999 = vst [vmem:[%s137 + $0xa18] sm:$0xff] %v1487
        %2000 = vst [vmem:[%s137 + $0xa20] sm:$0xff] %v1488
        %2001 = vst [vmem:[%s137 + $0xa28] sm:$0xff] %v1489
        %2002 = vst [vmem:[%s137 + $0xa30] sm:$0xff] %v1490
        %2003 = vst [vmem:[%s137 + $0xa38] sm:$0xff] %v1491
        %2004 = vst [vmem:[%s137 + $0xa40] sm:$0xff] %v1492
        %2005 = vst [vmem:[%s137 + $0xa48] sm:$0xff] %v1493
        %2006 = vst [vmem:[%s137 + $0xa50] sm:$0xff] %v1494
        %2007 = vst [vmem:[%s137 + $0xa58] sm:$0xff] %v1495
        %2008 = vst [vmem:[%s137 + $0xa60] sm:$0xff] %v1496
        %2009 = vst [vmem:[%s137 + $0xa68] sm:$0xff] %v1497
        %2010 = vst [vmem:[%s137 + $0xa70] sm:$0xff] %v1498
        %2011 = vst [vmem:[%s137 + $0xa78] sm:$0xff] %v1499
        %2012 = vst [vmem:[%s137 + $0xa80] sm:$0xff] %v1500
        %2013 = vst [vmem:[%s137 + $0xa88] sm:$0xff] %v1501
        %2014 = vst [vmem:[%s137 + $0xa90] sm:$0xff] %v1502
        %2015 = vst [vmem:[%s137 + $0xa98] sm:$0xff] %v1503
        %2016 = vst [vmem:[%s137 + $0xaa0] sm:$0xff] %v1504
        %2017 = vst [vmem:[%s137 + $0xaa8] sm:$0xff] %v1505
        %2018 = vst [vmem:[%s137 + $0xab0] sm:$0xff] %v1506
        %2019 = vst [vmem:[%s137 + $0xab8] sm:$0xff] %v1507
        %2020 = vst [vmem:[%s137 + $0xac0] sm:$0xff] %v1508
        %2021 = vst [vmem:[%s137 + $0xac8] sm:$0xff] %v1509
        %2022 = vst [vmem:[%s137 + $0xad0] sm:$0xff] %v1510
        %2023 = vst [vmem:[%s137 + $0xad8] sm:$0xff] %v1511
        %2024 = vst [vmem:[%s137 + $0xae0] sm:$0xff] %v1512
        %2025 = vst [vmem:[%s137 + $0xae8] sm:$0xff] %v1513
        %2026 = vst [vmem:[%s137 + $0xaf0] sm:$0xff] %v1514
        %2027 = vst [vmem:[%s137 + $0xaf8] sm:$0xff] %v1515
        %2028 = vst [vmem:[%s137 + $0xb00] sm:$0xff] %v1516
        %2029 = vst [vmem:[%s137 + $0xb08] sm:$0xff] %v1517
        %2030 = vst [vmem:[%s137 + $0xb10] sm:$0xff] %v1518
        %2031 = vst [vmem:[%s137 + $0xb18] sm:$0xff] %v1519
        %2032 = vst [vmem:[%s137 + $0xb20] sm:$0xff] %v1520
        %2033 = vst [vmem:[%s137 + $0xb28] sm:$0xff] %v1521
        %2034 = vst [vmem:[%s137 + $0xb30] sm:$0xff] %v1522
        %2035 = vst [vmem:[%s137 + $0xb38] sm:$0xff] %v1523
        %2036 = vst [vmem:[%s137 + $0xb40] sm:$0xff] %v1524
        %2037 = vst [vmem:[%s137 + $0xb48] sm:$0xff] %v1525
        %2038 = vst [vmem:[%s137 + $0xb50] sm:$0xff] %v1526
        %2039 = vst [vmem:[%s137 + $0xb58] sm:$0xff] %v1527
        %2040 = vst [vmem:[%s137 + $0xb60] sm:$0xff] %v1528
        %2041 = vst [vmem:[%s137 + $0xb68] sm:$0xff] %v1529
        %2042 = vst [vmem:[%s137 + $0xb70] sm:$0xff] %v1530
        %2043 = vst [vmem:[%s137 + $0xb78] sm:$0xff] %v1531
        %2044 = vst [vmem:[%s137 + $0xb80] sm:$0xff] %v1532
        %2045 = vst [vmem:[%s137 + $0xb88] sm:$0xff] %v1533
        %2046 = vst [vmem:[%s137 + $0xb90] sm:$0xff] %v1534
        %2047 = vst [vmem:[%s137 + $0xb98] sm:$0xff] %v1535
        %2048 = vst [vmem:[%s137 + $0xba0] sm:$0xff] %v1536
        %2049 = vst [vmem:[%s137 + $0xba8] sm:$0xff] %v1537
        %2050 = vst [vmem:[%s137 + $0xbb0] sm:$0xff] %v1538
        %2051 = vst [vmem:[%s137 + $0xbb8] sm:$0xff] %v1539
        %2052 = vst [vmem:[%s137 + $0xbc0] sm:$0xff] %v1540
        %2053 = vst [vmem:[%s137 + $0xbc8] sm:$0xff] %v1541
        %2054 = vst [vmem:[%s137 + $0xbd0] sm:$0xff] %v1542
        %2055 = vst [vmem:[%s137 + $0xbd8] sm:$0xff] %v1543
        %2056 = vst [vmem:[%s137 + $0xbe0] sm:$0xff] %v1544
        %2057 = vst [vmem:[%s137 + $0xbe8] sm:$0xff] %v1545
        %2058 = vst [vmem:[%s137 + $0xbf0] sm:$0xff] %v1546
        %2059 = vst [vmem:[%s137 + $0xbf8] sm:$0xff] %v1547
        %2060 = vst [vmem:[%s137 + $0xc00] sm:$0xff] %v1548
        %2061 = vst [vmem:[%s137 + $0xc08] sm:$0xff] %v1549
        %2062 = vst [vmem:[%s137 + $0xc10] sm:$0xff] %v1550
        %2063 = vst [vmem:[%s137 + $0xc18] sm:$0xff] %v1551
        %2064 = vst [vmem:[%s137 + $0xc20] sm:$0xff] %v1552
        %2065 = vst [vmem:[%s137 + $0xc28] sm:$0xff] %v1553
        %2066 = vst [vmem:[%s137 + $0xc30] sm:$0xff] %v1554
        %2067 = vst [vmem:[%s137 + $0xc38] sm:$0xff] %v1555
        %2068 = vst [vmem:[%s137 + $0xc40] sm:$0xff] %v1556
        %2069 = vst [vmem:[%s137 + $0xc48] sm:$0xff] %v1557
        %2070 = vst [vmem:[%s137 + $0xc50] sm:$0xff] %v1558
        %2071 = vst [vmem:[%s137 + $0xc58] sm:$0xff] %v1559
        %2072 = vst [vmem:[%s137 + $0xc60] sm:$0xff] %v1560
        %2073 = vst [vmem:[%s137 + $0xc68] sm:$0xff] %v1561
        %2074 = vst [vmem:[%s137 + $0xc70] sm:$0xff] %v1562
        %2075 = vst [vmem:[%s137 + $0xc78] sm:$0xff] %v1563
        %2076 = vst [vmem:[%s137 + $0xc80] sm:$0xff] %v1564
        %2077 = vst [vmem:[%s137 + $0xc88] sm:$0xff] %v1565
        %2078 = vst [vmem:[%s137 + $0xc90] sm:$0xff] %v1566
        %2079 = vst [vmem:[%s137 + $0xc98] sm:$0xff] %v1567
        %2080 = vst [vmem:[%s137 + $0xca0] sm:$0xff] %v1568
        %2081 = vst [vmem:[%s137 + $0xca8] sm:$0xff] %v1569
        %2082 = vst [vmem:[%s137 + $0xcb0] sm:$0xff] %v1570
        %2083 = vst [vmem:[%s137 + $0xcb8] sm:$0xff] %v1571
        %2084 = vst [vmem:[%s137 + $0xcc0] sm:$0xff] %v1572
        %2085 = vst [vmem:[%s137 + $0xcc8] sm:$0xff] %v1573
        %2086 = vst [vmem:[%s137 + $0xcd0] sm:$0xff] %v1574
        %2087 = vst [vmem:[%s137 + $0xcd8] sm:$0xff] %v1575
        %2088 = vst [vmem:[%s137 + $0xce0] sm:$0xff] %v1576
        %2089 = vst [vmem:[%s137 + $0xce8] sm:$0xff] %v1577
        %2090 = vst [vmem:[%s137 + $0xcf0] sm:$0xff] %v1578
        %2091 = vst [vmem:[%s137 + $0xcf8] sm:$0xff] %v1579
        %2092 = vst [vmem:[%s137 + $0xd00] sm:$0xff] %v1580
        %2093 = vst [vmem:[%s137 + $0xd08] sm:$0xff] %v1581
        %2094 = vst [vmem:[%s137 + $0xd10] sm:$0xff] %v1582
        %2095 = vst [vmem:[%s137 + $0xd18] sm:$0xff] %v1583
        %2096 = vst [vmem:[%s137 + $0xd20] sm:$0xff] %v1584
        %2097 = vst [vmem:[%s137 + $0xd28] sm:$0xff] %v1585
        %2098 = vst [vmem:[%s137 + $0xd30] sm:$0xff] %v1586
        %2099 = vst [vmem:[%s137 + $0xd38] sm:$0xff] %v1587
        %2100 = vst [vmem:[%s137 + $0xd40] sm:$0xff] %v1588
        %2101 = vst [vmem:[%s137 + $0xd48] sm:$0xff] %v1589
        %2102 = vst [vmem:[%s137 + $0xd50] sm:$0xff] %v1590
        %2103 = vst [vmem:[%s137 + $0xd58] sm:$0xff] %v1591
        %2104 = vst [vmem:[%s137 + $0xd60] sm:$0xff] %v1592
        %2105 = vst [vmem:[%s137 + $0xd68] sm:$0xff] %v1593
        %2106 = vst [vmem:[%s137 + $0xd70] sm:$0xff] %v1594
        %2107 = vst [vmem:[%s137 + $0xd78] sm:$0xff] %v1595
        %2108 = vst [vmem:[%s137 + $0xd80] sm:$0xff] %v1596
        %2109 = vst [vmem:[%s137 + $0xd88] sm:$0xff] %v1597
        %2110 = vst [vmem:[%s137 + $0xd90] sm:$0xff] %v1598
        %2111 = vst [vmem:[%s137 + $0xd98] sm:$0xff] %v1599
        %2112 = vst [vmem:[%s137 + $0xda0] sm:$0xff] %v1600
        %2113 = vst [vmem:[%s137 + $0xda8] sm:$0xff] %v1601
        %2114 = vst [vmem:[%s137 + $0xdb0] sm:$0xff] %v1602
        %2115 = vst [vmem:[%s137 + $0xdb8] sm:$0xff] %v1603
        %2116 = vst [vmem:[%s137 + $0xdc0] sm:$0xff] %v1604
        %2117 = vst [vmem:[%s137 + $0xdc8] sm:$0xff] %v1605
        %2118 = vst [vmem:[%s137 + $0xdd0] sm:$0xff] %v1606
        %2119 = vst [vmem:[%s137 + $0xdd8] sm:$0xff] %v1607
        %2120 = vst [vmem:[%s137 + $0xde0] sm:$0xff] %v1608
        %2121 = vst [vmem:[%s137 + $0xde8] sm:$0xff] %v1609
        %2122 = vst [vmem:[%s137 + $0xdf0] sm:$0xff] %v1610
        %2123 = vst [vmem:[%s137 + $0xdf8] sm:$0xff] %v1611
        %2124 = vst [vmem:[%s137 + $0xe00] sm:$0xff] %v1612
        %2125 = vst [vmem:[%s137 + $0xe08] sm:$0xff] %v1613
        %2126 = vst [vmem:[%s137 + $0xe10] sm:$0xff] %v1614
        %2127 = vst [vmem:[%s137 + $0xe18] sm:$0xff] %v1615
        %2128 = vst [vmem:[%s137 + $0xe20] sm:$0xff] %v1616
        %2129 = vst [vmem:[%s137 + $0xe28] sm:$0xff] %v1617
        %2130 = vst [vmem:[%s137 + $0xe30] sm:$0xff] %v1618
        %2131 = vst [vmem:[%s137 + $0xe38] sm:$0xff] %v1619
        %2132 = vst [vmem:[%s137 + $0xe40] sm:$0xff] %v1620
        %2133 = vst [vmem:[%s137 + $0xe48] sm:$0xff] %v1621
        %2134 = vst [vmem:[%s137 + $0xe50] sm:$0xff] %v1622
        %2135 = vst [vmem:[%s137 + $0xe58] sm:$0xff] %v1623
        %2136 = vst [vmem:[%s137 + $0xe60] sm:$0xff] %v1624
        %2137 = vst [vmem:[%s137 + $0xe68] sm:$0xff] %v1625
        %2138 = vst [vmem:[%s137 + $0xe70] sm:$0xff] %v1626
        %2139 = vst [vmem:[%s137 + $0xe78] sm:$0xff] %v1627
        %2140 = vst [vmem:[%s137 + $0xe80] sm:$0xff] %v1628
        %2141 = vst [vmem:[%s137 + $0xe88] sm:$0xff] %v1629
        %2142 = vst [vmem:[%s137 + $0xe90] sm:$0xff] %v1630
        %2143 = vst [vmem:[%s137 + $0xe98] sm:$0xff] %v1631
        %2144 = vst [vmem:[%s137 + $0xea0] sm:$0xff] %v1632
        %2145 = vst [vmem:[%s137 + $0xea8] sm:$0xff] %v1633
        %2146 = vst [vmem:[%s137 + $0xeb0] sm:$0xff] %v1634
        %2147 = vst [vmem:[%s137 + $0xeb8] sm:$0xff] %v1635
        %2148 = vst [vmem:[%s137 + $0xec0] sm:$0xff] %v1636
        %2149 = vst [vmem:[%s137 + $0xec8] sm:$0xff] %v1637
        %2150 = vst [vmem:[%s137 + $0xed0] sm:$0xff] %v1638
        %2151 = vst [vmem:[%s137 + $0xed8] sm:$0xff] %v1639
        %2152 = vst [vmem:[%s137 + $0xee0] sm:$0xff] %v1640
        %2153 = vst [vmem:[%s137 + $0xee8] sm:$0xff] %v1641
        %2154 = vst [vmem:[%s137 + $0xef0] sm:$0xff] %v1642
        %2155 = vst [vmem:[%s137 + $0xef8] sm:$0xff] %v1643
        %2156 = vst [vmem:[%s137 + $0xf00] sm:$0xff] %v1644
        %2157 = vst [vmem:[%s137 + $0xf08] sm:$0xff] %v1645
        %2158 = vst [vmem:[%s137 + $0xf10] sm:$0xff] %v1646
        %2159 = vst [vmem:[%s137 + $0xf18] sm:$0xff] %v1647
        %2160 = vst [vmem:[%s137 + $0xf20] sm:$0xff] %v1648
        %2161 = vst [vmem:[%s137 + $0xf28] sm:$0xff] %v1649
        %2162 = vst [vmem:[%s137 + $0xf30] sm:$0xff] %v1650
        %2163 = vst [vmem:[%s137 + $0xf38] sm:$0xff] %v1651
        %2164 = vst [vmem:[%s137 + $0xf40] sm:$0xff] %v1652
        %2165 = vst [vmem:[%s137 + $0xf48] sm:$0xff] %v1653
        %2166 = vst [vmem:[%s137 + $0xf50] sm:$0xff] %v1654
        %2167 = vst [vmem:[%s137 + $0xf58] sm:$0xff] %v1655
        %2168 = vst [vmem:[%s137 + $0xf60] sm:$0xff] %v1656
        %2169 = vst [vmem:[%s137 + $0xf68] sm:$0xff] %v1657
        %2170 = vst [vmem:[%s137 + $0xf70] sm:$0xff] %v1658
        %2171 = vst [vmem:[%s137 + $0xf78] sm:$0xff] %v1659
        %2172 = vst [vmem:[%s137 + $0xf80] sm:$0xff] %v1660
        %2173 = vst [vmem:[%s137 + $0xf88] sm:$0xff] %v1661
        %2174 = vst [vmem:[%s137 + $0xf90] sm:$0xff] %v1662
        %2175 = vst [vmem:[%s137 + $0xf98] sm:$0xff] %v1663
        %2176 = vst [vmem:[%s137 + $0xfa0] sm:$0xff] %v1664
        %2177 = vst [vmem:[%s137 + $0xfa8] sm:$0xff] %v1665
        %2178 = vst [vmem:[%s137 + $0xfb0] sm:$0xff] %v1666
        %2179 = vst [vmem:[%s137 + $0xfb8] sm:$0xff] %v1667
        %2180 = vst [vmem:[%s137 + $0xfc0] sm:$0xff] %v1668
        %2181 = vst [vmem:[%s137 + $0xfc8] sm:$0xff] %v1669
        %2182 = vst [vmem:[%s137 + $0xfd0] sm:$0xff] %v1670
        %2183 = vst [vmem:[%s137 + $0xfd8] sm:$0xff] %v1671
        %2184 = vst [vmem:[%s137 + $0xfe0] sm:$0xff] %v1672
        %2185 = vst [vmem:[%s137 + $0xfe8] sm:$0xff] %v1673
        %2186 = vst [vmem:[%s137 + $0xff0] sm:$0xff] %v1674
        %2187 = vst [vmem:[%s137 + $0xff8] sm:$0xff] %v1675
        %s2188 = sand.u32 %s52, 1
        %s2189 = scalar_lea.sflag [#allocation4], %s2188
        %s2190 = sand.u32 %s52, 1
        %s2191 = smul.addr %s2190, 4096
        %s2192 = scalar_lea.vmem [#allocation5], %s2191
        // Predicated region
        $region29: #{tpu_custom_call.1} parent=23 // pred_check
          %p2193 = pneg %p62
        $region30: #{tpu_custom_call.1} parent=23 // pred_check_branch
          %2195 = sbr.rel (%p2193) target = $region32
        $region31: #{tpu_custom_call.1} parent=23 // pred_region
          %s2196 = smul.u32 32, %s18
          %2198 = vsyncadd %s2189, 0
          %s2199 = smul.addr %s2196, 16
          %s2200 = smul.addr %s2199, 8
          %s2201 = scalar_lea.hbm %s1, %s2200
          %s2202 = sshll.u32 %s2192, 4
          %s2203 = int_to_ptr.vmem [resolvable:$true] %s2202
          %s2204 = sshll.u32 %s2201, 4
          %s2205 = int_to_ptr.hbm [resolvable:$true] %s2204
          %2210 = dma.vmem_to_hbm [thread:$0]  %s2203, 65536, %s2205, %s2189, 2048, 2048, 128
        $region32: #{tpu_custom_call.1} parent=23 // pred_fallthru
          _
      $region24: #{tpu_custom_call.1} parent=5 // pred_fallthru
        _
      %p2211 = scmp.le.s32.totalorder 2, %s13
      // Predicated region
      $region33: #{tpu_custom_call.1} parent=5 // pred_check
        %p2212 = pneg %p2211
      $region34: #{tpu_custom_call.1} parent=5 // pred_check_branch
        %2214 = sbr.rel (%p2212) target = $region36
      $region35: #{tpu_custom_call.1} parent=5 // pred_region
        %s2215 = ssub.s32 %s13, 2
        // Predicated region
        $region37: #{tpu_custom_call.1} parent=35 // pred_check
          %p2216 = pneg %p68
        $region38: #{tpu_custom_call.1} parent=35 // pred_check_branch
          %2218 = sbr.rel (%p2216) target = $region40
        $region39: #{tpu_custom_call.1} parent=35 // pred_region
          %s2219 = sand.u32 %s53, 1
          %s2220 = scalar_lea.sflag [#allocation4], %s2219
          %s2221 = sand.u32 %s53, 1
          %s2222 = smul.addr %s2221, 4096
          %s2223 = scalar_lea.vmem [#allocation5], %s2222
          %2225 = dma.done %s2220, 65536
        $region40: #{tpu_custom_call.1} parent=35 // pred_fallthru
          _
      $region36: #{tpu_custom_call.1} parent=5 // pred_fallthru
        _
    $region6: #{tpu_custom_call.1} parent=1 // loop_footer
      %s17 = sadd.s32 1, %s13
    $region7: #{tpu_custom_call.1} parent=1 // loop_footer_branch
      %12 = sbr.rel target = $region3
    $region8: #{tpu_custom_call.1} parent=1 // loop_exit
      _
    %2226 = vsyncpa [#allocation3], 1
    %s2227 = scalar_lea.sflag [#allocation3], 1
    %2228 = vsyncpa %s2227, 1
    %2229 = vsyncpa [#allocation4], 1
    %s2230 = scalar_lea.sflag [#allocation4], 1
    %2231 = vsyncpa %s2230, 1

</llo_original>
